<compile_context>
chip_gen: v5e
topology: v5e:2x2
jax: 0.10.0
libtpu: 0.0.40
codegen_flags: <defaults>
</compile_context>

<pallas_src>
import functools

import jax
import jax.numpy as jnp
from jax import lax
from jax.experimental import pallas as pl
from jax.experimental.pallas import tpu as pltpu


def timbre_kernel(x_ref, w_comb_ref, b_comb_ref, w_hh_ref,
                  w_heads_ref, b_heads_ref,
                  feat_ref, heads_ref,
                  gx_ref, *, head_sizes):
    T, TB, Din = x_ref.shape
    H = w_hh_ref.shape[0]
    G = 4 * H
    NP = w_heads_ref.shape[1]

    # ---- fused (input Linear o LSTM input projection): one matmul, time-major ----
    x = x_ref[...]                                          # [T, TB, Din] f32
    gx = jnp.dot(x.reshape(T * TB, Din), w_comb_ref[...],
                 preferred_element_type=jnp.float32) + b_comb_ref[...]
    gx_ref[...] = gx.reshape(T, TB, G)                      # contiguous: no swapaxes

    # ---- LSTM recurrence (PyTorch gate order: i, f, g, o) ----
    lane_g = lax.broadcasted_iota(jnp.int32, (TB, G), 1)
    g_mask = (lane_g >= 2 * H) & (lane_g < 3 * H)           # hoisted out of the loop

    def step(t, carry):
        h, c = carry
        gates = gx_ref[t] + jnp.dot(h, w_hh_ref[...],
                                    preferred_element_type=jnp.float32)
        # two full-width EUP passes + one VPU select instead of 4 sub-width passes
        act = jnp.where(g_mask, jnp.tanh(gates), jax.nn.sigmoid(gates))
        i = act[:, 0:H]
        f = act[:, H:2 * H]
        g = act[:, 2 * H:3 * H]
        o = act[:, 3 * H:4 * H]
        c_new = f * c + i * g
        h_new = o * jnp.tanh(c_new)
        return (h_new, c_new)

    h0 = jnp.zeros((TB, H), jnp.float32)
    c0 = jnp.zeros((TB, H), jnp.float32)
    h, _ = lax.fori_loop(0, T, step, (h0, c0), unroll=True)

    feat_ref[...] = h.astype(feat_ref.dtype)

    # ---- fused heads: one [H, NP] matmul, activations via lane masks, one
    #      lane-dense [TB, NP] store (no narrow masked stores) ----
    z = jnp.dot(h, w_heads_ref[...],
                preferred_element_type=jnp.float32) + b_heads_ref[...]
    lane = lax.broadcasted_iota(jnp.int32, (TB, NP), 1)

    n_inst, n_fam, n_vel, n_qual = head_sizes
    b0 = 0
    b1 = n_inst
    b2 = b1 + n_fam
    b3 = b2 + n_vel
    b4 = b3 + n_qual

    def seg_log_softmax(start, stop):
        mask = (lane >= start) & (lane < stop)
        zm = jnp.where(mask, z, -jnp.inf)
        m = jnp.max(zm, axis=1, keepdims=True)
        p = jnp.where(mask, jnp.exp(z - m), 0.0)
        lse = jnp.log(jnp.sum(p, axis=1, keepdims=True)) + m
        return mask, z - lse

    m_inst, ls_inst = seg_log_softmax(b0, b1)
    m_fam, ls_fam = seg_log_softmax(b1, b2)
    m_vel, ls_vel = seg_log_softmax(b2, b3)
    m_qual = (lane >= b3) & (lane < b4)

    out = jnp.where(m_inst, ls_inst,
          jnp.where(m_fam, ls_fam,
          jnp.where(m_vel, ls_vel,
          jnp.where(m_qual, jax.nn.sigmoid(z), jnp.zeros_like(z)))))
    heads_ref[...] = out.astype(heads_ref.dtype)


def timbre_encoder_forward(x, params):
    """x: [B, C, F, T] float32. Returns (feature, inst, fam, vel, qualities)."""
    B, C, Fdim, T = x.shape
    Din = C * Fdim
    H = params["w_hh"].shape[0]
    G = 4 * H
    n_inst = params["w_inst"].shape[1]
    n_fam = params["w_fam"].shape[1]
    n_vel = params["w_vel"].shape[1]
    n_qual = params["w_qual"].shape[1]
    n_heads = n_inst + n_fam + n_vel + n_qual
    NP = ((n_heads + 127) // 128) * 128               # lane-padded fused-head width

    # glue: [B, C, F, T] -> [B, C*F, T] -> time-major [T, B, C*F]
    x_tm = jnp.transpose(x.reshape(B, Din, T), (2, 0, 1)).astype(jnp.float32)

    # pad batch (sublane) dim to a multiple of 8
    TB = 8
    B_pad = ((B + TB - 1) // TB) * TB
    if B_pad != B:
        x_tm = jnp.pad(x_tm, ((0, 0), (0, B_pad - B), (0, 0)))

    # fold input Linear into the LSTM input matmul (no nonlinearity in between)
    w_comb = jnp.dot(params["w_in"], params["w_ih"])                      # [Din, 4H]
    b_comb = jnp.dot(params["b_in"], params["w_ih"]) + params["b_lstm"]   # [1, 4H]

    # fuse + lane-pad the 4 heads
    w_heads = jnp.concatenate([params["w_inst"], params["w_fam"],
                               params["w_vel"], params["w_qual"]], axis=1)
    b_heads = jnp.concatenate([params["b_inst"], params["b_fam"],
                               params["b_vel"], params["b_qual"]], axis=1)
    w_heads = jnp.pad(w_heads, ((0, 0), (0, NP - n_heads)))
    b_heads = jnp.pad(b_heads, ((0, 0), (0, NP - n_heads)))

    kernel = functools.partial(timbre_kernel,
                               head_sizes=(n_inst, n_fam, n_vel, n_qual))

    flops = (2 * B_pad * T * Din * G          # fused input-projection matmul
             + 2 * B_pad * T * H * G          # recurrent matmul
             + 2 * B_pad * H * NP)            # fused heads matmul
    transcendentals = B_pad * T * (2 * G + H) + B_pad * NP
    bytes_accessed = 4 * (x_tm.size + w_comb.size + b_comb.size
                          + params["w_hh"].size + w_heads.size + b_heads.size
                          + B_pad * H + B_pad * NP)

    feat_out, heads_out = pl.pallas_call(
        kernel,
        out_shape=(jax.ShapeDtypeStruct((B_pad, H), jnp.float32),
                   jax.ShapeDtypeStruct((B_pad, NP), jnp.float32)),
        grid_spec=pltpu.PrefetchScalarGridSpec(
            num_scalar_prefetch=0,
            grid=(B_pad // TB,),
            in_specs=[
                pl.BlockSpec((T, TB, Din), lambda b: (0, b, 0)),   # x (time-major)
                pl.BlockSpec((Din, G), lambda b: (0, 0)),          # W_comb
                pl.BlockSpec((1, G), lambda b: (0, 0)),            # b_comb
                pl.BlockSpec((H, G), lambda b: (0, 0)),            # W_hh
                pl.BlockSpec((H, NP), lambda b: (0, 0)),           # fused head weights
                pl.BlockSpec((1, NP), lambda b: (0, 0)),           # fused head bias
            ],
            out_specs=(
                pl.BlockSpec((TB, H), lambda b: (b, 0)),           # feature
                pl.BlockSpec((TB, NP), lambda b: (b, 0)),          # lane-dense head slab
            ),
            scratch_shapes=[pltpu.VMEM((T, TB, G), jnp.float32)],  # gx (time-major)
        ),
        compiler_params=pltpu.CompilerParams(
            dimension_semantics=("parallel",)),
        cost_estimate=pl.CostEstimate(flops=flops,
                                      transcendentals=transcendentals,
                                      bytes_accessed=bytes_accessed),
    )(x_tm, w_comb, b_comb, params["w_hh"], w_heads, b_heads)

    feature = feat_out[:B]
    s0, s1 = 0, n_inst
    inst = heads_out[:B, s0:s1]
    s0, s1 = s1, s1 + n_fam
    fam = heads_out[:B, s0:s1]
    s0, s1 = s1, s1 + n_vel
    vel = heads_out[:B, s0:s1]
    s0, s1 = s1, s1 + n_qual
    qual = heads_out[:B, s0:s1]
    return feature, inst, fam, vel, qual


# ------------------------- pure-JAX reference (for a smoke check) -------------------------
def timbre_encoder_reference(x, params):
    B, C, Fdim, T = x.shape
    Din = C * Fdim
    H = params["w_hh"].shape[0]
    xs = jnp.transpose(x.reshape(B, Din, T), (0, 2, 1))          # [B, T, Din]
    xp = jnp.dot(xs, params["w_in"]) + params["b_in"]            # [B, T, F]

    def step(carry, x_t):
        h, c = carry
        gates = (jnp.dot(x_t, params["w_ih"]) + params["b_lstm"]
                 + jnp.dot(h, params["w_hh"]))
        i = jax.nn.sigmoid(gates[:, 0:H])
        f = jax.nn.sigmoid(gates[:, H:2 * H])
        g = jnp.tanh(gates[:, 2 * H:3 * H])
        o = jax.nn.sigmoid(gates[:, 3 * H:4 * H])
        c = f * c + i * g
        h = o * jnp.tanh(c)
        return (h, c), None

    (h, _), _ = lax.scan(step,
                         (jnp.zeros((B, H), jnp.float32),
                          jnp.zeros((B, H), jnp.float32)),
                         jnp.swapaxes(xp, 0, 1))
    inst = jax.nn.log_softmax(jnp.dot(h, params["w_inst"]) + params["b_inst"], axis=1)
    fam = jax.nn.log_softmax(jnp.dot(h, params["w_fam"]) + params["b_fam"], axis=1)
    vel = jax.nn.log_softmax(jnp.dot(h, params["w_vel"]) + params["b_vel"], axis=1)
    qual = jax.nn.sigmoid(jnp.dot(h, params["w_qual"]) + params["b_qual"])
    return h, inst, fam, vel, qual


# ------------------------------------- param init -----------------------------------------
def _uinit(key, shape, fan_in):
    bound = 1.0 / jnp.sqrt(jnp.float32(fan_in))
    return jax.random.uniform(key, shape, jnp.float32, -bound, bound)


def make_params(key, input_dim, feature_dim, hidden_dim,
                n_inst, n_fam, n_vel, n_qual):
    ks = jax.random.split(key, 16)
    p = {}
    # input linear: [Din, F]
    p["w_in"] = _uinit(ks[0], (input_dim, feature_dim), input_dim)
    p["b_in"] = _uinit(ks[1], (1, feature_dim), input_dim)
    # LSTM (gate order i,f,g,o), stored transposed for right-multiplication
    p["w_ih"] = _uinit(ks[2], (feature_dim, 4 * hidden_dim), hidden_dim)
    p["w_hh"] = _uinit(ks[3], (hidden_dim, 4 * hidden_dim), hidden_dim)
    # combined bias_ih + bias_hh
    p["b_lstm"] = (_uinit(ks[4], (1, 4 * hidden_dim), hidden_dim)
                   + _uinit(ks[5], (1, 4 * hidden_dim), hidden_dim))
    # heads
    p["w_inst"] = _uinit(ks[6], (hidden_dim, n_inst), hidden_dim)
    p["b_inst"] = _uinit(ks[7], (1, n_inst), hidden_dim)
    p["w_fam"] = _uinit(ks[8], (hidden_dim, n_fam), hidden_dim)
    p["b_fam"] = _uinit(ks[9], (1, n_fam), hidden_dim)
    p["w_vel"] = _uinit(ks[10], (hidden_dim, n_vel), hidden_dim)
    p["b_vel"] = _uinit(ks[11], (1, n_vel), hidden_dim)
    p["w_qual"] = _uinit(ks[12], (hidden_dim, n_qual), hidden_dim)
    p["b_qual"] = _uinit(ks[13], (1, n_qual), hidden_dim)
    return p


if __name__ == "__main__":
    key = jax.random.PRNGKey(0)
    # x is [B, C, F, T]
    B, C, Fdim, T = 2, 4, 16, 16
    input_dim = C * Fdim          # 64
    feature_dim = 32
    hidden_dim = 32
    n_inst, n_fam, n_vel, n_qual = 11, 5, 4, 10

    k_x, k_p = jax.random.split(key)
    x = jax.random.normal(k_x, (B, C, Fdim, T), jnp.float32)
    params = make_params(k_p, input_dim, feature_dim, hidden_dim,
                         n_inst, n_fam, n_vel, n_qual)

    outs = timbre_encoder_forward(x, params)
    outs = jax.block_until_ready(outs)
    feature, inst, fam, vel, qual = outs

    assert feature.shape == (B, hidden_dim)
    assert inst.shape == (B, n_inst)
    assert fam.shape == (B, n_fam)
    assert vel.shape == (B, n_vel)
    assert qual.shape == (B, n_qual)

    # smoke-check against a pure-JAX reference (loose tolerance absorbs MXU
    # default-precision differences between the folded and unfolded matmul paths)
    refs = timbre_encoder_reference(x, params)
    for got, want in zip(outs, refs):
        assert got.shape == want.shape
        assert bool(jnp.all(jnp.isfinite(got)))
        assert bool(jnp.allclose(got, want, atol=1e-1, rtol=1e-1)), float(
            jnp.max(jnp.abs(got - want)))

    print("KERNEL_OK")
</pallas_src>

<mosaic_0001>
module attributes {stable_mosaic.version = 11 : i64} {
  func.func @timbre_kernel(%arg0: i32, %arg1: memref<16x8x64xf32, #tpu.memory_space<vmem>>, %arg2: memref<64x128xf32, #tpu.memory_space<vmem>>, %arg3: memref<1x128xf32, #tpu.memory_space<vmem>>, %arg4: memref<32x128xf32, #tpu.memory_space<vmem>>, %arg5: memref<32x128xf32, #tpu.memory_space<vmem>>, %arg6: memref<1x128xf32, #tpu.memory_space<vmem>>, %arg7: memref<8x32xf32, #tpu.memory_space<vmem>>, %arg8: memref<8x128xf32, #tpu.memory_space<vmem>>, %arg9: memref<16x8x128xf32, #tpu.memory_space<vmem>>) attributes {dimension_semantics = [#tpu.dimension_semantics<parallel>], iteration_bounds = array<i64: 1>, scalar_prefetch = 0 : i64, scratch_operands = 1 : i64, tpu.core_type = #tpu.core_type<tc>, window_params = [{transform_indices = @transform_0, window_bounds = array<i64: 16, 8, 64>}, {pipeline_mode = #tpu.pipeline_mode<synchronous>, transform_indices = @transform_1, window_bounds = array<i64: 64, 128>}, {pipeline_mode = #tpu.pipeline_mode<synchronous>, transform_indices = @transform_2, window_bounds = array<i64: 1, 128>}, {pipeline_mode = #tpu.pipeline_mode<synchronous>, transform_indices = @transform_3, window_bounds = array<i64: 32, 128>}, {pipeline_mode = #tpu.pipeline_mode<synchronous>, transform_indices = @transform_4, window_bounds = array<i64: 32, 128>}, {pipeline_mode = #tpu.pipeline_mode<synchronous>, transform_indices = @transform_5, window_bounds = array<i64: 1, 128>}, {transform_indices = @transform_6, window_bounds = array<i64: 8, 32>}, {transform_indices = @transform_7, window_bounds = array<i64: 8, 128>}]} {
    %c0 = arith.constant 0 : index
    %c0_0 = arith.constant 0 : index
    %c0_1 = arith.constant 0 : index
    %0 = vector.load %arg1[%c0, %c0_0, %c0_1] : memref<16x8x64xf32, #tpu.memory_space<vmem>>, vector<16x8x64xf32>
    %1 = vector.shape_cast %0 : vector<16x8x64xf32> to vector<128x64xf32>
    %c0_2 = arith.constant 0 : index
    %c0_3 = arith.constant 0 : index
    %2 = vector.load %arg2[%c0_2, %c0_3] : memref<64x128xf32, #tpu.memory_space<vmem>>, vector<64x128xf32>
    %cst = arith.constant dense<0.000000e+00> : vector<128x128xf32>
    %3 = tpu.matmul %1, %2, %cst {dimension_numbers = #tpu.dot_dimension_numbers<[1], [0], [0], [1], [0, 0, 1, 1], [], []>} : vector<128x64xf32>, vector<64x128xf32>, vector<128x128xf32> -> vector<128x128xf32>
    %c0_4 = arith.constant 0 : index
    %c0_5 = arith.constant 0 : index
    %4 = vector.load %arg3[%c0_4, %c0_5] : memref<1x128xf32, #tpu.memory_space<vmem>>, vector<1x128xf32>
    %5 = vector.broadcast %4 : vector<1x128xf32> to vector<128x128xf32>
    %6 = arith.addf %3, %5 : vector<128x128xf32>
    %7 = vector.shape_cast %6 : vector<128x128xf32> to vector<16x8x128xf32>
    %c0_6 = arith.constant 0 : index
    %c0_7 = arith.constant 0 : index
    %c0_8 = arith.constant 0 : index
    %8 = vector.load %arg9[%c0_6, %c0_7, %c0_8] : memref<16x8x128xf32, #tpu.memory_space<vmem>>, vector<16x8x128xf32>
    tpu.vector_store %arg9[%c0_6, %c0_7, %c0_8], %7 {strides = array<i32>} : memref<16x8x128xf32, #tpu.memory_space<vmem>>, vector<16x8x128xf32>,
    %9 = tpu.iota {dimensions = array<i32: 1>} : vector<8x128xi32>
    %c64_i32 = arith.constant 64 : i32
    %10 = vector.broadcast %c64_i32 : i32 to vector<8x128xi32>
    %11 = arith.cmpi sge, %9, %10 : vector<8x128xi32>
    %c96_i32 = arith.constant 96 : i32
    %12 = vector.broadcast %c96_i32 : i32 to vector<8x128xi32>
    %13 = arith.cmpi slt, %9, %12 : vector<8x128xi32>
    %14 = arith.andi %11, %13 : vector<8x128xi1>
    %cst_9 = arith.constant 0.000000e+00 : f32
    %15 = vector.broadcast %cst_9 : f32 to vector<8x32xf32>
    %cst_10 = arith.constant 0.000000e+00 : f32
    %16 = vector.broadcast %cst_10 : f32 to vector<8x32xf32>
    %c0_i32 = arith.constant 0 : i32
    %17 = arith.index_cast %c0_i32 : i32 to index
    %c0_11 = arith.constant 0 : index
    %c0_12 = arith.constant 0 : index
    %18 = vector.load %arg9[%17, %c0_11, %c0_12] : memref<16x8x128xf32, #tpu.memory_space<vmem>>, vector<1x8x128xf32>
    %19 = vector.shape_cast %18 : vector<1x8x128xf32> to vector<8x128xf32>
    %c0_13 = arith.constant 0 : index
    %c0_14 = arith.constant 0 : index
    %20 = vector.load %arg4[%c0_13, %c0_14] : memref<32x128xf32, #tpu.memory_space<vmem>>, vector<32x128xf32>
    %cst_15 = arith.constant dense<0.000000e+00> : vector<8x128xf32>
    %21 = tpu.matmul %15, %20, %cst_15 {dimension_numbers = #tpu.dot_dimension_numbers<[1], [0], [0], [1], [0, 0, 1, 1], [], []>} : vector<8x32xf32>, vector<32x128xf32>, vector<8x128xf32> -> vector<8x128xf32>
    %22 = arith.addf %19, %21 : vector<8x128xf32>
    %23 = math.tanh %22 : vector<8x128xf32>
    %24 = arith.negf %22 : vector<8x128xf32>
    %25 = math.exp %24 : vector<8x128xf32>
    %cst_16 = arith.constant 1.000000e+00 : f32
    %26 = vector.broadcast %cst_16 : f32 to vector<8x128xf32>
    %27 = arith.addf %26, %25 : vector<8x128xf32>
    %28 = arith.divf %26, %27 : vector<8x128xf32>
    %29 = arith.select %14, %23, %28 : vector<8x128xi1>, vector<8x128xf32>
    %30 = vector.extract_strided_slice %29 {offsets = [0, 0], sizes = [8, 32], strides = [1, 1]} : vector<8x128xf32> to vector<8x32xf32>
    %31 = vector.extract_strided_slice %29 {offsets = [0, 32], sizes = [8, 32], strides = [1, 1]} : vector<8x128xf32> to vector<8x32xf32>
    %32 = vector.extract_strided_slice %29 {offsets = [0, 64], sizes = [8, 32], strides = [1, 1]} : vector<8x128xf32> to vector<8x32xf32>
    %33 = vector.extract_strided_slice %29 {offsets = [0, 96], sizes = [8, 32], strides = [1, 1]} : vector<8x128xf32> to vector<8x32xf32>
    %34 = arith.mulf %31, %16 : vector<8x32xf32>
    %35 = arith.mulf %30, %32 : vector<8x32xf32>
    %36 = arith.addf %34, %35 : vector<8x32xf32>
    %37 = math.tanh %36 : vector<8x32xf32>
    %38 = arith.mulf %33, %37 : vector<8x32xf32>
    %c1_i32 = arith.constant 1 : i32
    %39 = arith.index_cast %c1_i32 : i32 to index
    %c0_17 = arith.constant 0 : index
    %c0_18 = arith.constant 0 : index
    %40 = vector.load %arg9[%39, %c0_17, %c0_18] : memref<16x8x128xf32, #tpu.memory_space<vmem>>, vector<1x8x128xf32>
    %41 = vector.shape_cast %40 : vector<1x8x128xf32> to vector<8x128xf32>
    %c0_19 = arith.constant 0 : index
    %c0_20 = arith.constant 0 : index
    %42 = vector.load %arg4[%c0_19, %c0_20] : memref<32x128xf32, #tpu.memory_space<vmem>>, vector<32x128xf32>
    %cst_21 = arith.constant dense<0.000000e+00> : vector<8x128xf32>
    %43 = tpu.matmul %38, %42, %cst_21 {dimension_numbers = #tpu.dot_dimension_numbers<[1], [0], [0], [1], [0, 0, 1, 1], [], []>} : vector<8x32xf32>, vector<32x128xf32>, vector<8x128xf32> -> vector<8x128xf32>
    %44 = arith.addf %41, %43 : vector<8x128xf32>
    %45 = math.tanh %44 : vector<8x128xf32>
    %46 = arith.negf %44 : vector<8x128xf32>
    %47 = math.exp %46 : vector<8x128xf32>
    %cst_22 = arith.constant 1.000000e+00 : f32
    %48 = vector.broadcast %cst_22 : f32 to vector<8x128xf32>
    %49 = arith.addf %48, %47 : vector<8x128xf32>
    %50 = arith.divf %48, %49 : vector<8x128xf32>
    %51 = arith.select %14, %45, %50 : vector<8x128xi1>, vector<8x128xf32>
    %52 = vector.extract_strided_slice %51 {offsets = [0, 0], sizes = [8, 32], strides = [1, 1]} : vector<8x128xf32> to vector<8x32xf32>
    %53 = vector.extract_strided_slice %51 {offsets = [0, 32], sizes = [8, 32], strides = [1, 1]} : vector<8x128xf32> to vector<8x32xf32>
    %54 = vector.extract_strided_slice %51 {offsets = [0, 64], sizes = [8, 32], strides = [1, 1]} : vector<8x128xf32> to vector<8x32xf32>
    %55 = vector.extract_strided_slice %51 {offsets = [0, 96], sizes = [8, 32], strides = [1, 1]} : vector<8x128xf32> to vector<8x32xf32>
    %56 = arith.mulf %53, %36 : vector<8x32xf32>
    %57 = arith.mulf %52, %54 : vector<8x32xf32>
    %58 = arith.addf %56, %57 : vector<8x32xf32>
    %59 = math.tanh %58 : vector<8x32xf32>
    %60 = arith.mulf %55, %59 : vector<8x32xf32>
    %c2_i32 = arith.constant 2 : i32
    %61 = arith.index_cast %c2_i32 : i32 to index
    %c0_23 = arith.constant 0 : index
    %c0_24 = arith.constant 0 : index
    %62 = vector.load %arg9[%61, %c0_23, %c0_24] : memref<16x8x128xf32, #tpu.memory_space<vmem>>, vector<1x8x128xf32>
    %63 = vector.shape_cast %62 : vector<1x8x128xf32> to vector<8x128xf32>
    %c0_25 = arith.constant 0 : index
    %c0_26 = arith.constant 0 : index
    %64 = vector.load %arg4[%c0_25, %c0_26] : memref<32x128xf32, #tpu.memory_space<vmem>>, vector<32x128xf32>
    %cst_27 = arith.constant dense<0.000000e+00> : vector<8x128xf32>
    %65 = tpu.matmul %60, %64, %cst_27 {dimension_numbers = #tpu.dot_dimension_numbers<[1], [0], [0], [1], [0, 0, 1, 1], [], []>} : vector<8x32xf32>, vector<32x128xf32>, vector<8x128xf32> -> vector<8x128xf32>
    %66 = arith.addf %63, %65 : vector<8x128xf32>
    %67 = math.tanh %66 : vector<8x128xf32>
    %68 = arith.negf %66 : vector<8x128xf32>
    %69 = math.exp %68 : vector<8x128xf32>
    %cst_28 = arith.constant 1.000000e+00 : f32
    %70 = vector.broadcast %cst_28 : f32 to vector<8x128xf32>
    %71 = arith.addf %70, %69 : vector<8x128xf32>
    %72 = arith.divf %70, %71 : vector<8x128xf32>
    %73 = arith.select %14, %67, %72 : vector<8x128xi1>, vector<8x128xf32>
    %74 = vector.extract_strided_slice %73 {offsets = [0, 0], sizes = [8, 32], strides = [1, 1]} : vector<8x128xf32> to vector<8x32xf32>
    %75 = vector.extract_strided_slice %73 {offsets = [0, 32], sizes = [8, 32], strides = [1, 1]} : vector<8x128xf32> to vector<8x32xf32>
    %76 = vector.extract_strided_slice %73 {offsets = [0, 64], sizes = [8, 32], strides = [1, 1]} : vector<8x128xf32> to vector<8x32xf32>
    %77 = vector.extract_strided_slice %73 {offsets = [0, 96], sizes = [8, 32], strides = [1, 1]} : vector<8x128xf32> to vector<8x32xf32>
    %78 = arith.mulf %75, %58 : vector<8x32xf32>
    %79 = arith.mulf %74, %76 : vector<8x32xf32>
    %80 = arith.addf %78, %79 : vector<8x32xf32>
    %81 = math.tanh %80 : vector<8x32xf32>
    %82 = arith.mulf %77, %81 : vector<8x32xf32>
    %c3_i32 = arith.constant 3 : i32
    %83 = arith.index_cast %c3_i32 : i32 to index
    %c0_29 = arith.constant 0 : index
    %c0_30 = arith.constant 0 : index
    %84 = vector.load %arg9[%83, %c0_29, %c0_30] : memref<16x8x128xf32, #tpu.memory_space<vmem>>, vector<1x8x128xf32>
    %85 = vector.shape_cast %84 : vector<1x8x128xf32> to vector<8x128xf32>
    %c0_31 = arith.constant 0 : index
    %c0_32 = arith.constant 0 : index
    %86 = vector.load %arg4[%c0_31, %c0_32] : memref<32x128xf32, #tpu.memory_space<vmem>>, vector<32x128xf32>
    %cst_33 = arith.constant dense<0.000000e+00> : vector<8x128xf32>
    %87 = tpu.matmul %82, %86, %cst_33 {dimension_numbers = #tpu.dot_dimension_numbers<[1], [0], [0], [1], [0, 0, 1, 1], [], []>} : vector<8x32xf32>, vector<32x128xf32>, vector<8x128xf32> -> vector<8x128xf32>
    %88 = arith.addf %85, %87 : vector<8x128xf32>
    %89 = math.tanh %88 : vector<8x128xf32>
    %90 = arith.negf %88 : vector<8x128xf32>
    %91 = math.exp %90 : vector<8x128xf32>
    %cst_34 = arith.constant 1.000000e+00 : f32
    %92 = vector.broadcast %cst_34 : f32 to vector<8x128xf32>
    %93 = arith.addf %92, %91 : vector<8x128xf32>
    %94 = arith.divf %92, %93 : vector<8x128xf32>
    %95 = arith.select %14, %89, %94 : vector<8x128xi1>, vector<8x128xf32>
    %96 = vector.extract_strided_slice %95 {offsets = [0, 0], sizes = [8, 32], strides = [1, 1]} : vector<8x128xf32> to vector<8x32xf32>
    %97 = vector.extract_strided_slice %95 {offsets = [0, 32], sizes = [8, 32], strides = [1, 1]} : vector<8x128xf32> to vector<8x32xf32>
    %98 = vector.extract_strided_slice %95 {offsets = [0, 64], sizes = [8, 32], strides = [1, 1]} : vector<8x128xf32> to vector<8x32xf32>
    %99 = vector.extract_strided_slice %95 {offsets = [0, 96], sizes = [8, 32], strides = [1, 1]} : vector<8x128xf32> to vector<8x32xf32>
    %100 = arith.mulf %97, %80 : vector<8x32xf32>
    %101 = arith.mulf %96, %98 : vector<8x32xf32>
    %102 = arith.addf %100, %101 : vector<8x32xf32>
    %103 = math.tanh %102 : vector<8x32xf32>
    %104 = arith.mulf %99, %103 : vector<8x32xf32>
    %c4_i32 = arith.constant 4 : i32
    %105 = arith.index_cast %c4_i32 : i32 to index
    %c0_35 = arith.constant 0 : index
    %c0_36 = arith.constant 0 : index
    %106 = vector.load %arg9[%105, %c0_35, %c0_36] : memref<16x8x128xf32, #tpu.memory_space<vmem>>, vector<1x8x128xf32>
    %107 = vector.shape_cast %106 : vector<1x8x128xf32> to vector<8x128xf32>
    %c0_37 = arith.constant 0 : index
    %c0_38 = arith.constant 0 : index
    %108 = vector.load %arg4[%c0_37, %c0_38] : memref<32x128xf32, #tpu.memory_space<vmem>>, vector<32x128xf32>
    %cst_39 = arith.constant dense<0.000000e+00> : vector<8x128xf32>
    %109 = tpu.matmul %104, %108, %cst_39 {dimension_numbers = #tpu.dot_dimension_numbers<[1], [0], [0], [1], [0, 0, 1, 1], [], []>} : vector<8x32xf32>, vector<32x128xf32>, vector<8x128xf32> -> vector<8x128xf32>
    %110 = arith.addf %107, %109 : vector<8x128xf32>
    %111 = math.tanh %110 : vector<8x128xf32>
    %112 = arith.negf %110 : vector<8x128xf32>
    %113 = math.exp %112 : vector<8x128xf32>
    %cst_40 = arith.constant 1.000000e+00 : f32
    %114 = vector.broadcast %cst_40 : f32 to vector<8x128xf32>
    %115 = arith.addf %114, %113 : vector<8x128xf32>
    %116 = arith.divf %114, %115 : vector<8x128xf32>
    %117 = arith.select %14, %111, %116 : vector<8x128xi1>, vector<8x128xf32>
    %118 = vector.extract_strided_slice %117 {offsets = [0, 0], sizes = [8, 32], strides = [1, 1]} : vector<8x128xf32> to vector<8x32xf32>
    %119 = vector.extract_strided_slice %117 {offsets = [0, 32], sizes = [8, 32], strides = [1, 1]} : vector<8x128xf32> to vector<8x32xf32>
    %120 = vector.extract_strided_slice %117 {offsets = [0, 64], sizes = [8, 32], strides = [1, 1]} : vector<8x128xf32> to vector<8x32xf32>
    %121 = vector.extract_strided_slice %117 {offsets = [0, 96], sizes = [8, 32], strides = [1, 1]} : vector<8x128xf32> to vector<8x32xf32>
    %122 = arith.mulf %119, %102 : vector<8x32xf32>
    %123 = arith.mulf %118, %120 : vector<8x32xf32>
    %124 = arith.addf %122, %123 : vector<8x32xf32>
    %125 = math.tanh %124 : vector<8x32xf32>
    %126 = arith.mulf %121, %125 : vector<8x32xf32>
    %c5_i32 = arith.constant 5 : i32
    %127 = arith.index_cast %c5_i32 : i32 to index
    %c0_41 = arith.constant 0 : index
    %c0_42 = arith.constant 0 : index
    %128 = vector.load %arg9[%127, %c0_41, %c0_42] : memref<16x8x128xf32, #tpu.memory_space<vmem>>, vector<1x8x128xf32>
    %129 = vector.shape_cast %128 : vector<1x8x128xf32> to vector<8x128xf32>
    %c0_43 = arith.constant 0 : index
    %c0_44 = arith.constant 0 : index
    %130 = vector.load %arg4[%c0_43, %c0_44] : memref<32x128xf32, #tpu.memory_space<vmem>>, vector<32x128xf32>
    %cst_45 = arith.constant dense<0.000000e+00> : vector<8x128xf32>
    %131 = tpu.matmul %126, %130, %cst_45 {dimension_numbers = #tpu.dot_dimension_numbers<[1], [0], [0], [1], [0, 0, 1, 1], [], []>} : vector<8x32xf32>, vector<32x128xf32>, vector<8x128xf32> -> vector<8x128xf32>
    %132 = arith.addf %129, %131 : vector<8x128xf32>
    %133 = math.tanh %132 : vector<8x128xf32>
    %134 = arith.negf %132 : vector<8x128xf32>
    %135 = math.exp %134 : vector<8x128xf32>
    %cst_46 = arith.constant 1.000000e+00 : f32
    %136 = vector.broadcast %cst_46 : f32 to vector<8x128xf32>
    %137 = arith.addf %136, %135 : vector<8x128xf32>
    %138 = arith.divf %136, %137 : vector<8x128xf32>
    %139 = arith.select %14, %133, %138 : vector<8x128xi1>, vector<8x128xf32>
    %140 = vector.extract_strided_slice %139 {offsets = [0, 0], sizes = [8, 32], strides = [1, 1]} : vector<8x128xf32> to vector<8x32xf32>
    %141 = vector.extract_strided_slice %139 {offsets = [0, 32], sizes = [8, 32], strides = [1, 1]} : vector<8x128xf32> to vector<8x32xf32>
    %142 = vector.extract_strided_slice %139 {offsets = [0, 64], sizes = [8, 32], strides = [1, 1]} : vector<8x128xf32> to vector<8x32xf32>
    %143 = vector.extract_strided_slice %139 {offsets = [0, 96], sizes = [8, 32], strides = [1, 1]} : vector<8x128xf32> to vector<8x32xf32>
    %144 = arith.mulf %141, %124 : vector<8x32xf32>
    %145 = arith.mulf %140, %142 : vector<8x32xf32>
    %146 = arith.addf %144, %145 : vector<8x32xf32>
    %147 = math.tanh %146 : vector<8x32xf32>
    %148 = arith.mulf %143, %147 : vector<8x32xf32>
    %c6_i32 = arith.constant 6 : i32
    %149 = arith.index_cast %c6_i32 : i32 to index
    %c0_47 = arith.constant 0 : index
    %c0_48 = arith.constant 0 : index
    %150 = vector.load %arg9[%149, %c0_47, %c0_48] : memref<16x8x128xf32, #tpu.memory_space<vmem>>, vector<1x8x128xf32>
    %151 = vector.shape_cast %150 : vector<1x8x128xf32> to vector<8x128xf32>
    %c0_49 = arith.constant 0 : index
    %c0_50 = arith.constant 0 : index
    %152 = vector.load %arg4[%c0_49, %c0_50] : memref<32x128xf32, #tpu.memory_space<vmem>>, vector<32x128xf32>
    %cst_51 = arith.constant dense<0.000000e+00> : vector<8x128xf32>
    %153 = tpu.matmul %148, %152, %cst_51 {dimension_numbers = #tpu.dot_dimension_numbers<[1], [0], [0], [1], [0, 0, 1, 1], [], []>} : vector<8x32xf32>, vector<32x128xf32>, vector<8x128xf32> -> vector<8x128xf32>
    %154 = arith.addf %151, %153 : vector<8x128xf32>
    %155 = math.tanh %154 : vector<8x128xf32>
    %156 = arith.negf %154 : vector<8x128xf32>
    %157 = math.exp %156 : vector<8x128xf32>
    %cst_52 = arith.constant 1.000000e+00 : f32
    %158 = vector.broadcast %cst_52 : f32 to vector<8x128xf32>
    %159 = arith.addf %158, %157 : vector<8x128xf32>
    %160 = arith.divf %158, %159 : vector<8x128xf32>
    %161 = arith.select %14, %155, %160 : vector<8x128xi1>, vector<8x128xf32>
    %162 = vector.extract_strided_slice %161 {offsets = [0, 0], sizes = [8, 32], strides = [1, 1]} : vector<8x128xf32> to vector<8x32xf32>
    %163 = vector.extract_strided_slice %161 {offsets = [0, 32], sizes = [8, 32], strides = [1, 1]} : vector<8x128xf32> to vector<8x32xf32>
    %164 = vector.extract_strided_slice %161 {offsets = [0, 64], sizes = [8, 32], strides = [1, 1]} : vector<8x128xf32> to vector<8x32xf32>
    %165 = vector.extract_strided_slice %161 {offsets = [0, 96], sizes = [8, 32], strides = [1, 1]} : vector<8x128xf32> to vector<8x32xf32>
    %166 = arith.mulf %163, %146 : vector<8x32xf32>
    %167 = arith.mulf %162, %164 : vector<8x32xf32>
    %168 = arith.addf %166, %167 : vector<8x32xf32>
    %169 = math.tanh %168 : vector<8x32xf32>
    %170 = arith.mulf %165, %169 : vector<8x32xf32>
    %c7_i32 = arith.constant 7 : i32
    %171 = arith.index_cast %c7_i32 : i32 to index
    %c0_53 = arith.constant 0 : index
    %c0_54 = arith.constant 0 : index
    %172 = vector.load %arg9[%171, %c0_53, %c0_54] : memref<16x8x128xf32, #tpu.memory_space<vmem>>, vector<1x8x128xf32>
    %173 = vector.shape_cast %172 : vector<1x8x128xf32> to vector<8x128xf32>
    %c0_55 = arith.constant 0 : index
    %c0_56 = arith.constant 0 : index
    %174 = vector.load %arg4[%c0_55, %c0_56] : memref<32x128xf32, #tpu.memory_space<vmem>>, vector<32x128xf32>
    %cst_57 = arith.constant dense<0.000000e+00> : vector<8x128xf32>
    %175 = tpu.matmul %170, %174, %cst_57 {dimension_numbers = #tpu.dot_dimension_numbers<[1], [0], [0], [1], [0, 0, 1, 1], [], []>} : vector<8x32xf32>, vector<32x128xf32>, vector<8x128xf32> -> vector<8x128xf32>
    %176 = arith.addf %173, %175 : vector<8x128xf32>
    %177 = math.tanh %176 : vector<8x128xf32>
    %178 = arith.negf %176 : vector<8x128xf32>
    %179 = math.exp %178 : vector<8x128xf32>
    %cst_58 = arith.constant 1.000000e+00 : f32
    %180 = vector.broadcast %cst_58 : f32 to vector<8x128xf32>
    %181 = arith.addf %180, %179 : vector<8x128xf32>
    %182 = arith.divf %180, %181 : vector<8x128xf32>
    %183 = arith.select %14, %177, %182 : vector<8x128xi1>, vector<8x128xf32>
    %184 = vector.extract_strided_slice %183 {offsets = [0, 0], sizes = [8, 32], strides = [1, 1]} : vector<8x128xf32> to vector<8x32xf32>
    %185 = vector.extract_strided_slice %183 {offsets = [0, 32], sizes = [8, 32], strides = [1, 1]} : vector<8x128xf32> to vector<8x32xf32>
    %186 = vector.extract_strided_slice %183 {offsets = [0, 64], sizes = [8, 32], strides = [1, 1]} : vector<8x128xf32> to vector<8x32xf32>
    %187 = vector.extract_strided_slice %183 {offsets = [0, 96], sizes = [8, 32], strides = [1, 1]} : vector<8x128xf32> to vector<8x32xf32>
    %188 = arith.mulf %185, %168 : vector<8x32xf32>
    %189 = arith.mulf %184, %186 : vector<8x32xf32>
    %190 = arith.addf %188, %189 : vector<8x32xf32>
    %191 = math.tanh %190 : vector<8x32xf32>
    %192 = arith.mulf %187, %191 : vector<8x32xf32>
    %c8_i32 = arith.constant 8 : i32
    %193 = arith.index_cast %c8_i32 : i32 to index
    %c0_59 = arith.constant 0 : index
    %c0_60 = arith.constant 0 : index
    %194 = vector.load %arg9[%193, %c0_59, %c0_60] : memref<16x8x128xf32, #tpu.memory_space<vmem>>, vector<1x8x128xf32>
    %195 = vector.shape_cast %194 : vector<1x8x128xf32> to vector<8x128xf32>
    %c0_61 = arith.constant 0 : index
    %c0_62 = arith.constant 0 : index
    %196 = vector.load %arg4[%c0_61, %c0_62] : memref<32x128xf32, #tpu.memory_space<vmem>>, vector<32x128xf32>
    %cst_63 = arith.constant dense<0.000000e+00> : vector<8x128xf32>
    %197 = tpu.matmul %192, %196, %cst_63 {dimension_numbers = #tpu.dot_dimension_numbers<[1], [0], [0], [1], [0, 0, 1, 1], [], []>} : vector<8x32xf32>, vector<32x128xf32>, vector<8x128xf32> -> vector<8x128xf32>
    %198 = arith.addf %195, %197 : vector<8x128xf32>
    %199 = math.tanh %198 : vector<8x128xf32>
    %200 = arith.negf %198 : vector<8x128xf32>
    %201 = math.exp %200 : vector<8x128xf32>
    %cst_64 = arith.constant 1.000000e+00 : f32
    %202 = vector.broadcast %cst_64 : f32 to vector<8x128xf32>
    %203 = arith.addf %202, %201 : vector<8x128xf32>
    %204 = arith.divf %202, %203 : vector<8x128xf32>
    %205 = arith.select %14, %199, %204 : vector<8x128xi1>, vector<8x128xf32>
    %206 = vector.extract_strided_slice %205 {offsets = [0, 0], sizes = [8, 32], strides = [1, 1]} : vector<8x128xf32> to vector<8x32xf32>
    %207 = vector.extract_strided_slice %205 {offsets = [0, 32], sizes = [8, 32], strides = [1, 1]} : vector<8x128xf32> to vector<8x32xf32>
    %208 = vector.extract_strided_slice %205 {offsets = [0, 64], sizes = [8, 32], strides = [1, 1]} : vector<8x128xf32> to vector<8x32xf32>
    %209 = vector.extract_strided_slice %205 {offsets = [0, 96], sizes = [8, 32], strides = [1, 1]} : vector<8x128xf32> to vector<8x32xf32>
    %210 = arith.mulf %207, %190 : vector<8x32xf32>
    %211 = arith.mulf %206, %208 : vector<8x32xf32>
    %212 = arith.addf %210, %211 : vector<8x32xf32>
    %213 = math.tanh %212 : vector<8x32xf32>
    %214 = arith.mulf %209, %213 : vector<8x32xf32>
    %c9_i32 = arith.constant 9 : i32
    %215 = arith.index_cast %c9_i32 : i32 to index
    %c0_65 = arith.constant 0 : index
    %c0_66 = arith.constant 0 : index
    %216 = vector.load %arg9[%215, %c0_65, %c0_66] : memref<16x8x128xf32, #tpu.memory_space<vmem>>, vector<1x8x128xf32>
    %217 = vector.shape_cast %216 : vector<1x8x128xf32> to vector<8x128xf32>
    %c0_67 = arith.constant 0 : index
    %c0_68 = arith.constant 0 : index
    %218 = vector.load %arg4[%c0_67, %c0_68] : memref<32x128xf32, #tpu.memory_space<vmem>>, vector<32x128xf32>
    %cst_69 = arith.constant dense<0.000000e+00> : vector<8x128xf32>
    %219 = tpu.matmul %214, %218, %cst_69 {dimension_numbers = #tpu.dot_dimension_numbers<[1], [0], [0], [1], [0, 0, 1, 1], [], []>} : vector<8x32xf32>, vector<32x128xf32>, vector<8x128xf32> -> vector<8x128xf32>
    %220 = arith.addf %217, %219 : vector<8x128xf32>
    %221 = math.tanh %220 : vector<8x128xf32>
    %222 = arith.negf %220 : vector<8x128xf32>
    %223 = math.exp %222 : vector<8x128xf32>
    %cst_70 = arith.constant 1.000000e+00 : f32
    %224 = vector.broadcast %cst_70 : f32 to vector<8x128xf32>
    %225 = arith.addf %224, %223 : vector<8x128xf32>
    %226 = arith.divf %224, %225 : vector<8x128xf32>
    %227 = arith.select %14, %221, %226 : vector<8x128xi1>, vector<8x128xf32>
    %228 = vector.extract_strided_slice %227 {offsets = [0, 0], sizes = [8, 32], strides = [1, 1]} : vector<8x128xf32> to vector<8x32xf32>
    %229 = vector.extract_strided_slice %227 {offsets = [0, 32], sizes = [8, 32], strides = [1, 1]} : vector<8x128xf32> to vector<8x32xf32>
    %230 = vector.extract_strided_slice %227 {offsets = [0, 64], sizes = [8, 32], strides = [1, 1]} : vector<8x128xf32> to vector<8x32xf32>
    %231 = vector.extract_strided_slice %227 {offsets = [0, 96], sizes = [8, 32], strides = [1, 1]} : vector<8x128xf32> to vector<8x32xf32>
    %232 = arith.mulf %229, %212 : vector<8x32xf32>
    %233 = arith.mulf %228, %230 : vector<8x32xf32>
    %234 = arith.addf %232, %233 : vector<8x32xf32>
    %235 = math.tanh %234 : vector<8x32xf32>
    %236 = arith.mulf %231, %235 : vector<8x32xf32>
    %c10_i32 = arith.constant 10 : i32
    %237 = arith.index_cast %c10_i32 : i32 to index
    %c0_71 = arith.constant 0 : index
    %c0_72 = arith.constant 0 : index
    %238 = vector.load %arg9[%237, %c0_71, %c0_72] : memref<16x8x128xf32, #tpu.memory_space<vmem>>, vector<1x8x128xf32>
    %239 = vector.shape_cast %238 : vector<1x8x128xf32> to vector<8x128xf32>
    %c0_73 = arith.constant 0 : index
    %c0_74 = arith.constant 0 : index
    %240 = vector.load %arg4[%c0_73, %c0_74] : memref<32x128xf32, #tpu.memory_space<vmem>>, vector<32x128xf32>
    %cst_75 = arith.constant dense<0.000000e+00> : vector<8x128xf32>
    %241 = tpu.matmul %236, %240, %cst_75 {dimension_numbers = #tpu.dot_dimension_numbers<[1], [0], [0], [1], [0, 0, 1, 1], [], []>} : vector<8x32xf32>, vector<32x128xf32>, vector<8x128xf32> -> vector<8x128xf32>
    %242 = arith.addf %239, %241 : vector<8x128xf32>
    %243 = math.tanh %242 : vector<8x128xf32>
    %244 = arith.negf %242 : vector<8x128xf32>
    %245 = math.exp %244 : vector<8x128xf32>
    %cst_76 = arith.constant 1.000000e+00 : f32
    %246 = vector.broadcast %cst_76 : f32 to vector<8x128xf32>
    %247 = arith.addf %246, %245 : vector<8x128xf32>
    %248 = arith.divf %246, %247 : vector<8x128xf32>
    %249 = arith.select %14, %243, %248 : vector<8x128xi1>, vector<8x128xf32>
    %250 = vector.extract_strided_slice %249 {offsets = [0, 0], sizes = [8, 32], strides = [1, 1]} : vector<8x128xf32> to vector<8x32xf32>
    %251 = vector.extract_strided_slice %249 {offsets = [0, 32], sizes = [8, 32], strides = [1, 1]} : vector<8x128xf32> to vector<8x32xf32>
    %252 = vector.extract_strided_slice %249 {offsets = [0, 64], sizes = [8, 32], strides = [1, 1]} : vector<8x128xf32> to vector<8x32xf32>
    %253 = vector.extract_strided_slice %249 {offsets = [0, 96], sizes = [8, 32], strides = [1, 1]} : vector<8x128xf32> to vector<8x32xf32>
    %254 = arith.mulf %251, %234 : vector<8x32xf32>
    %255 = arith.mulf %250, %252 : vector<8x32xf32>
    %256 = arith.addf %254, %255 : vector<8x32xf32>
    %257 = math.tanh %256 : vector<8x32xf32>
    %258 = arith.mulf %253, %257 : vector<8x32xf32>
    %c11_i32 = arith.constant 11 : i32
    %259 = arith.index_cast %c11_i32 : i32 to index
    %c0_77 = arith.constant 0 : index
    %c0_78 = arith.constant 0 : index
    %260 = vector.load %arg9[%259, %c0_77, %c0_78] : memref<16x8x128xf32, #tpu.memory_space<vmem>>, vector<1x8x128xf32>
    %261 = vector.shape_cast %260 : vector<1x8x128xf32> to vector<8x128xf32>
    %c0_79 = arith.constant 0 : index
    %c0_80 = arith.constant 0 : index
    %262 = vector.load %arg4[%c0_79, %c0_80] : memref<32x128xf32, #tpu.memory_space<vmem>>, vector<32x128xf32>
    %cst_81 = arith.constant dense<0.000000e+00> : vector<8x128xf32>
    %263 = tpu.matmul %258, %262, %cst_81 {dimension_numbers = #tpu.dot_dimension_numbers<[1], [0], [0], [1], [0, 0, 1, 1], [], []>} : vector<8x32xf32>, vector<32x128xf32>, vector<8x128xf32> -> vector<8x128xf32>
    %264 = arith.addf %261, %263 : vector<8x128xf32>
    %265 = math.tanh %264 : vector<8x128xf32>
    %266 = arith.negf %264 : vector<8x128xf32>
    %267 = math.exp %266 : vector<8x128xf32>
    %cst_82 = arith.constant 1.000000e+00 : f32
    %268 = vector.broadcast %cst_82 : f32 to vector<8x128xf32>
    %269 = arith.addf %268, %267 : vector<8x128xf32>
    %270 = arith.divf %268, %269 : vector<8x128xf32>
    %271 = arith.select %14, %265, %270 : vector<8x128xi1>, vector<8x128xf32>
    %272 = vector.extract_strided_slice %271 {offsets = [0, 0], sizes = [8, 32], strides = [1, 1]} : vector<8x128xf32> to vector<8x32xf32>
    %273 = vector.extract_strided_slice %271 {offsets = [0, 32], sizes = [8, 32], strides = [1, 1]} : vector<8x128xf32> to vector<8x32xf32>
    %274 = vector.extract_strided_slice %271 {offsets = [0, 64], sizes = [8, 32], strides = [1, 1]} : vector<8x128xf32> to vector<8x32xf32>
    %275 = vector.extract_strided_slice %271 {offsets = [0, 96], sizes = [8, 32], strides = [1, 1]} : vector<8x128xf32> to vector<8x32xf32>
    %276 = arith.mulf %273, %256 : vector<8x32xf32>
    %277 = arith.mulf %272, %274 : vector<8x32xf32>
    %278 = arith.addf %276, %277 : vector<8x32xf32>
    %279 = math.tanh %278 : vector<8x32xf32>
    %280 = arith.mulf %275, %279 : vector<8x32xf32>
    %c12_i32 = arith.constant 12 : i32
    %281 = arith.index_cast %c12_i32 : i32 to index
    %c0_83 = arith.constant 0 : index
    %c0_84 = arith.constant 0 : index
    %282 = vector.load %arg9[%281, %c0_83, %c0_84] : memref<16x8x128xf32, #tpu.memory_space<vmem>>, vector<1x8x128xf32>
    %283 = vector.shape_cast %282 : vector<1x8x128xf32> to vector<8x128xf32>
    %c0_85 = arith.constant 0 : index
    %c0_86 = arith.constant 0 : index
    %284 = vector.load %arg4[%c0_85, %c0_86] : memref<32x128xf32, #tpu.memory_space<vmem>>, vector<32x128xf32>
    %cst_87 = arith.constant dense<0.000000e+00> : vector<8x128xf32>
    %285 = tpu.matmul %280, %284, %cst_87 {dimension_numbers = #tpu.dot_dimension_numbers<[1], [0], [0], [1], [0, 0, 1, 1], [], []>} : vector<8x32xf32>, vector<32x128xf32>, vector<8x128xf32> -> vector<8x128xf32>
    %286 = arith.addf %283, %285 : vector<8x128xf32>
    %287 = math.tanh %286 : vector<8x128xf32>
    %288 = arith.negf %286 : vector<8x128xf32>
    %289 = math.exp %288 : vector<8x128xf32>
    %cst_88 = arith.constant 1.000000e+00 : f32
    %290 = vector.broadcast %cst_88 : f32 to vector<8x128xf32>
    %291 = arith.addf %290, %289 : vector<8x128xf32>
    %292 = arith.divf %290, %291 : vector<8x128xf32>
    %293 = arith.select %14, %287, %292 : vector<8x128xi1>, vector<8x128xf32>
    %294 = vector.extract_strided_slice %293 {offsets = [0, 0], sizes = [8, 32], strides = [1, 1]} : vector<8x128xf32> to vector<8x32xf32>
    %295 = vector.extract_strided_slice %293 {offsets = [0, 32], sizes = [8, 32], strides = [1, 1]} : vector<8x128xf32> to vector<8x32xf32>
    %296 = vector.extract_strided_slice %293 {offsets = [0, 64], sizes = [8, 32], strides = [1, 1]} : vector<8x128xf32> to vector<8x32xf32>
    %297 = vector.extract_strided_slice %293 {offsets = [0, 96], sizes = [8, 32], strides = [1, 1]} : vector<8x128xf32> to vector<8x32xf32>
    %298 = arith.mulf %295, %278 : vector<8x32xf32>
    %299 = arith.mulf %294, %296 : vector<8x32xf32>
    %300 = arith.addf %298, %299 : vector<8x32xf32>
    %301 = math.tanh %300 : vector<8x32xf32>
    %302 = arith.mulf %297, %301 : vector<8x32xf32>
    %c13_i32 = arith.constant 13 : i32
    %303 = arith.index_cast %c13_i32 : i32 to index
    %c0_89 = arith.constant 0 : index
    %c0_90 = arith.constant 0 : index
    %304 = vector.load %arg9[%303, %c0_89, %c0_90] : memref<16x8x128xf32, #tpu.memory_space<vmem>>, vector<1x8x128xf32>
    %305 = vector.shape_cast %304 : vector<1x8x128xf32> to vector<8x128xf32>
    %c0_91 = arith.constant 0 : index
    %c0_92 = arith.constant 0 : index
    %306 = vector.load %arg4[%c0_91, %c0_92] : memref<32x128xf32, #tpu.memory_space<vmem>>, vector<32x128xf32>
    %cst_93 = arith.constant dense<0.000000e+00> : vector<8x128xf32>
    %307 = tpu.matmul %302, %306, %cst_93 {dimension_numbers = #tpu.dot_dimension_numbers<[1], [0], [0], [1], [0, 0, 1, 1], [], []>} : vector<8x32xf32>, vector<32x128xf32>, vector<8x128xf32> -> vector<8x128xf32>
    %308 = arith.addf %305, %307 : vector<8x128xf32>
    %309 = math.tanh %308 : vector<8x128xf32>
    %310 = arith.negf %308 : vector<8x128xf32>
    %311 = math.exp %310 : vector<8x128xf32>
    %cst_94 = arith.constant 1.000000e+00 : f32
    %312 = vector.broadcast %cst_94 : f32 to vector<8x128xf32>
    %313 = arith.addf %312, %311 : vector<8x128xf32>
    %314 = arith.divf %312, %313 : vector<8x128xf32>
    %315 = arith.select %14, %309, %314 : vector<8x128xi1>, vector<8x128xf32>
    %316 = vector.extract_strided_slice %315 {offsets = [0, 0], sizes = [8, 32], strides = [1, 1]} : vector<8x128xf32> to vector<8x32xf32>
    %317 = vector.extract_strided_slice %315 {offsets = [0, 32], sizes = [8, 32], strides = [1, 1]} : vector<8x128xf32> to vector<8x32xf32>
    %318 = vector.extract_strided_slice %315 {offsets = [0, 64], sizes = [8, 32], strides = [1, 1]} : vector<8x128xf32> to vector<8x32xf32>
    %319 = vector.extract_strided_slice %315 {offsets = [0, 96], sizes = [8, 32], strides = [1, 1]} : vector<8x128xf32> to vector<8x32xf32>
    %320 = arith.mulf %317, %300 : vector<8x32xf32>
    %321 = arith.mulf %316, %318 : vector<8x32xf32>
    %322 = arith.addf %320, %321 : vector<8x32xf32>
    %323 = math.tanh %322 : vector<8x32xf32>
    %324 = arith.mulf %319, %323 : vector<8x32xf32>
    %c14_i32 = arith.constant 14 : i32
    %325 = arith.index_cast %c14_i32 : i32 to index
    %c0_95 = arith.constant 0 : index
    %c0_96 = arith.constant 0 : index
    %326 = vector.load %arg9[%325, %c0_95, %c0_96] : memref<16x8x128xf32, #tpu.memory_space<vmem>>, vector<1x8x128xf32>
    %327 = vector.shape_cast %326 : vector<1x8x128xf32> to vector<8x128xf32>
    %c0_97 = arith.constant 0 : index
    %c0_98 = arith.constant 0 : index
    %328 = vector.load %arg4[%c0_97, %c0_98] : memref<32x128xf32, #tpu.memory_space<vmem>>, vector<32x128xf32>
    %cst_99 = arith.constant dense<0.000000e+00> : vector<8x128xf32>
    %329 = tpu.matmul %324, %328, %cst_99 {dimension_numbers = #tpu.dot_dimension_numbers<[1], [0], [0], [1], [0, 0, 1, 1], [], []>} : vector<8x32xf32>, vector<32x128xf32>, vector<8x128xf32> -> vector<8x128xf32>
    %330 = arith.addf %327, %329 : vector<8x128xf32>
    %331 = math.tanh %330 : vector<8x128xf32>
    %332 = arith.negf %330 : vector<8x128xf32>
    %333 = math.exp %332 : vector<8x128xf32>
    %cst_100 = arith.constant 1.000000e+00 : f32
    %334 = vector.broadcast %cst_100 : f32 to vector<8x128xf32>
    %335 = arith.addf %334, %333 : vector<8x128xf32>
    %336 = arith.divf %334, %335 : vector<8x128xf32>
    %337 = arith.select %14, %331, %336 : vector<8x128xi1>, vector<8x128xf32>
    %338 = vector.extract_strided_slice %337 {offsets = [0, 0], sizes = [8, 32], strides = [1, 1]} : vector<8x128xf32> to vector<8x32xf32>
    %339 = vector.extract_strided_slice %337 {offsets = [0, 32], sizes = [8, 32], strides = [1, 1]} : vector<8x128xf32> to vector<8x32xf32>
    %340 = vector.extract_strided_slice %337 {offsets = [0, 64], sizes = [8, 32], strides = [1, 1]} : vector<8x128xf32> to vector<8x32xf32>
    %341 = vector.extract_strided_slice %337 {offsets = [0, 96], sizes = [8, 32], strides = [1, 1]} : vector<8x128xf32> to vector<8x32xf32>
    %342 = arith.mulf %339, %322 : vector<8x32xf32>
    %343 = arith.mulf %338, %340 : vector<8x32xf32>
    %344 = arith.addf %342, %343 : vector<8x32xf32>
    %345 = math.tanh %344 : vector<8x32xf32>
    %346 = arith.mulf %341, %345 : vector<8x32xf32>
    %c15_i32 = arith.constant 15 : i32
    %347 = arith.index_cast %c15_i32 : i32 to index
    %c0_101 = arith.constant 0 : index
    %c0_102 = arith.constant 0 : index
    %348 = vector.load %arg9[%347, %c0_101, %c0_102] : memref<16x8x128xf32, #tpu.memory_space<vmem>>, vector<1x8x128xf32>
    %349 = vector.shape_cast %348 : vector<1x8x128xf32> to vector<8x128xf32>
    %c0_103 = arith.constant 0 : index
    %c0_104 = arith.constant 0 : index
    %350 = vector.load %arg4[%c0_103, %c0_104] : memref<32x128xf32, #tpu.memory_space<vmem>>, vector<32x128xf32>
    %cst_105 = arith.constant dense<0.000000e+00> : vector<8x128xf32>
    %351 = tpu.matmul %346, %350, %cst_105 {dimension_numbers = #tpu.dot_dimension_numbers<[1], [0], [0], [1], [0, 0, 1, 1], [], []>} : vector<8x32xf32>, vector<32x128xf32>, vector<8x128xf32> -> vector<8x128xf32>
    %352 = arith.addf %349, %351 : vector<8x128xf32>
    %353 = math.tanh %352 : vector<8x128xf32>
    %354 = arith.negf %352 : vector<8x128xf32>
    %355 = math.exp %354 : vector<8x128xf32>
    %cst_106 = arith.constant 1.000000e+00 : f32
    %356 = vector.broadcast %cst_106 : f32 to vector<8x128xf32>
    %357 = arith.addf %356, %355 : vector<8x128xf32>
    %358 = arith.divf %356, %357 : vector<8x128xf32>
    %359 = arith.select %14, %353, %358 : vector<8x128xi1>, vector<8x128xf32>
    %360 = vector.extract_strided_slice %359 {offsets = [0, 0], sizes = [8, 32], strides = [1, 1]} : vector<8x128xf32> to vector<8x32xf32>
    %361 = vector.extract_strided_slice %359 {offsets = [0, 32], sizes = [8, 32], strides = [1, 1]} : vector<8x128xf32> to vector<8x32xf32>
    %362 = vector.extract_strided_slice %359 {offsets = [0, 64], sizes = [8, 32], strides = [1, 1]} : vector<8x128xf32> to vector<8x32xf32>
    %363 = vector.extract_strided_slice %359 {offsets = [0, 96], sizes = [8, 32], strides = [1, 1]} : vector<8x128xf32> to vector<8x32xf32>
    %364 = arith.mulf %361, %344 : vector<8x32xf32>
    %365 = arith.mulf %360, %362 : vector<8x32xf32>
    %366 = arith.addf %364, %365 : vector<8x32xf32>
    %367 = math.tanh %366 : vector<8x32xf32>
    %368 = arith.mulf %363, %367 : vector<8x32xf32>
    %c16_i32 = arith.constant 16 : i32
    %c0_107 = arith.constant 0 : index
    %c0_108 = arith.constant 0 : index
    %369 = vector.load %arg7[%c0_107, %c0_108] : memref<8x32xf32, #tpu.memory_space<vmem>>, vector<8x32xf32>
    tpu.vector_store %arg7[%c0_107, %c0_108], %368 {strides = array<i32>} : memref<8x32xf32, #tpu.memory_space<vmem>>, vector<8x32xf32>,
    %c0_109 = arith.constant 0 : index
    %c0_110 = arith.constant 0 : index
    %370 = vector.load %arg5[%c0_109, %c0_110] : memref<32x128xf32, #tpu.memory_space<vmem>>, vector<32x128xf32>
    %cst_111 = arith.constant dense<0.000000e+00> : vector<8x128xf32>
    %371 = tpu.matmul %368, %370, %cst_111 {dimension_numbers = #tpu.dot_dimension_numbers<[1], [0], [0], [1], [0, 0, 1, 1], [], []>} : vector<8x32xf32>, vector<32x128xf32>, vector<8x128xf32> -> vector<8x128xf32>
    %c0_112 = arith.constant 0 : index
    %c0_113 = arith.constant 0 : index
    %372 = vector.load %arg6[%c0_112, %c0_113] : memref<1x128xf32, #tpu.memory_space<vmem>>, vector<1x128xf32>
    %373 = vector.broadcast %372 : vector<1x128xf32> to vector<8x128xf32>
    %374 = arith.addf %371, %373 : vector<8x128xf32>
    %375 = tpu.iota {dimensions = array<i32: 1>} : vector<8x128xi32>
    %c0_i32_114 = arith.constant 0 : i32
    %376 = vector.broadcast %c0_i32_114 : i32 to vector<8x128xi32>
    %377 = arith.cmpi sge, %375, %376 : vector<8x128xi32>
    %c11_i32_115 = arith.constant 11 : i32
    %378 = vector.broadcast %c11_i32_115 : i32 to vector<8x128xi32>
    %379 = arith.cmpi slt, %375, %378 : vector<8x128xi32>
    %380 = arith.andi %377, %379 : vector<8x128xi1>
    %cst_116 = arith.constant 0xFF800000 : f32
    %381 = vector.broadcast %cst_116 : f32 to vector<8x128xf32>
    %382 = arith.select %380, %374, %381 : vector<8x128xi1>, vector<8x128xf32>
    %cst_117 = arith.constant dense<0xFF800000> : vector<8xf32>
    %383 = vector.multi_reduction <maximumf>, %382, %cst_117 [1] : vector<8x128xf32> to vector<8xf32>
    %384 = vector.shape_cast %383 : vector<8xf32> to vector<8x1xf32>
    %385 = vector.broadcast %384 : vector<8x1xf32> to vector<8x128xf32>
    %386 = arith.subf %374, %385 : vector<8x128xf32>
    %387 = math.exp %386 : vector<8x128xf32>
    %cst_118 = arith.constant 0.000000e+00 : f32
    %388 = vector.broadcast %cst_118 : f32 to vector<8x128xf32>
    %389 = arith.select %380, %387, %388 : vector<8x128xi1>, vector<8x128xf32>
    %cst_119 = arith.constant dense<0.000000e+00> : vector<8xf32>
    %390 = vector.multi_reduction <add>, %389, %cst_119 [1] : vector<8x128xf32> to vector<8xf32>
    %391 = vector.shape_cast %390 : vector<8xf32> to vector<8x1xf32>
    %392 = math.log %391 : vector<8x1xf32>
    %393 = arith.addf %392, %384 : vector<8x1xf32>
    %394 = vector.broadcast %393 : vector<8x1xf32> to vector<8x128xf32>
    %395 = arith.subf %374, %394 : vector<8x128xf32>
    %c11_i32_120 = arith.constant 11 : i32
    %396 = vector.broadcast %c11_i32_120 : i32 to vector<8x128xi32>
    %397 = arith.cmpi sge, %375, %396 : vector<8x128xi32>
    %c16_i32_121 = arith.constant 16 : i32
    %398 = vector.broadcast %c16_i32_121 : i32 to vector<8x128xi32>
    %399 = arith.cmpi slt, %375, %398 : vector<8x128xi32>
    %400 = arith.andi %397, %399 : vector<8x128xi1>
    %cst_122 = arith.constant 0xFF800000 : f32
    %401 = vector.broadcast %cst_122 : f32 to vector<8x128xf32>
    %402 = arith.select %400, %374, %401 : vector<8x128xi1>, vector<8x128xf32>
    %cst_123 = arith.constant dense<0xFF800000> : vector<8xf32>
    %403 = vector.multi_reduction <maximumf>, %402, %cst_123 [1] : vector<8x128xf32> to vector<8xf32>
    %404 = vector.shape_cast %403 : vector<8xf32> to vector<8x1xf32>
    %405 = vector.broadcast %404 : vector<8x1xf32> to vector<8x128xf32>
    %406 = arith.subf %374, %405 : vector<8x128xf32>
    %407 = math.exp %406 : vector<8x128xf32>
    %cst_124 = arith.constant 0.000000e+00 : f32
    %408 = vector.broadcast %cst_124 : f32 to vector<8x128xf32>
    %409 = arith.select %400, %407, %408 : vector<8x128xi1>, vector<8x128xf32>
    %cst_125 = arith.constant dense<0.000000e+00> : vector<8xf32>
    %410 = vector.multi_reduction <add>, %409, %cst_125 [1] : vector<8x128xf32> to vector<8xf32>
    %411 = vector.shape_cast %410 : vector<8xf32> to vector<8x1xf32>
    %412 = math.log %411 : vector<8x1xf32>
    %413 = arith.addf %412, %404 : vector<8x1xf32>
    %414 = vector.broadcast %413 : vector<8x1xf32> to vector<8x128xf32>
    %415 = arith.subf %374, %414 : vector<8x128xf32>
    %c16_i32_126 = arith.constant 16 : i32
    %416 = vector.broadcast %c16_i32_126 : i32 to vector<8x128xi32>
    %417 = arith.cmpi sge, %375, %416 : vector<8x128xi32>
    %c20_i32 = arith.constant 20 : i32
    %418 = vector.broadcast %c20_i32 : i32 to vector<8x128xi32>
    %419 = arith.cmpi slt, %375, %418 : vector<8x128xi32>
    %420 = arith.andi %417, %419 : vector<8x128xi1>
    %cst_127 = arith.constant 0xFF800000 : f32
    %421 = vector.broadcast %cst_127 : f32 to vector<8x128xf32>
    %422 = arith.select %420, %374, %421 : vector<8x128xi1>, vector<8x128xf32>
    %cst_128 = arith.constant dense<0xFF800000> : vector<8xf32>
    %423 = vector.multi_reduction <maximumf>, %422, %cst_128 [1] : vector<8x128xf32> to vector<8xf32>
    %424 = vector.shape_cast %423 : vector<8xf32> to vector<8x1xf32>
    %425 = vector.broadcast %424 : vector<8x1xf32> to vector<8x128xf32>
    %426 = arith.subf %374, %425 : vector<8x128xf32>
    %427 = math.exp %426 : vector<8x128xf32>
    %cst_129 = arith.constant 0.000000e+00 : f32
    %428 = vector.broadcast %cst_129 : f32 to vector<8x128xf32>
    %429 = arith.select %420, %427, %428 : vector<8x128xi1>, vector<8x128xf32>
    %cst_130 = arith.constant dense<0.000000e+00> : vector<8xf32>
    %430 = vector.multi_reduction <add>, %429, %cst_130 [1] : vector<8x128xf32> to vector<8xf32>
    %431 = vector.shape_cast %430 : vector<8xf32> to vector<8x1xf32>
    %432 = math.log %431 : vector<8x1xf32>
    %433 = arith.addf %432, %424 : vector<8x1xf32>
    %434 = vector.broadcast %433 : vector<8x1xf32> to vector<8x128xf32>
    %435 = arith.subf %374, %434 : vector<8x128xf32>
    %c20_i32_131 = arith.constant 20 : i32
    %436 = vector.broadcast %c20_i32_131 : i32 to vector<8x128xi32>
    %437 = arith.cmpi sge, %375, %436 : vector<8x128xi32>
    %c30_i32 = arith.constant 30 : i32
    %438 = vector.broadcast %c30_i32 : i32 to vector<8x128xi32>
    %439 = arith.cmpi slt, %375, %438 : vector<8x128xi32>
    %440 = arith.andi %437, %439 : vector<8x128xi1>
    %441 = arith.negf %374 : vector<8x128xf32>
    %442 = math.exp %441 : vector<8x128xf32>
    %cst_132 = arith.constant 1.000000e+00 : f32
    %443 = vector.broadcast %cst_132 : f32 to vector<8x128xf32>
    %444 = arith.addf %443, %442 : vector<8x128xf32>
    %445 = arith.divf %443, %444 : vector<8x128xf32>
    %cst_133 = arith.constant 0.000000e+00 : f32
    %446 = vector.broadcast %cst_133 : f32 to vector<8x128xf32>
    %447 = arith.select %440, %445, %446 : vector<8x128xi1>, vector<8x128xf32>
    %448 = arith.select %420, %435, %447 : vector<8x128xi1>, vector<8x128xf32>
    %449 = arith.select %400, %415, %448 : vector<8x128xi1>, vector<8x128xf32>
    %450 = arith.select %380, %395, %449 : vector<8x128xi1>, vector<8x128xf32>
    %c0_134 = arith.constant 0 : index
    %c0_135 = arith.constant 0 : index
    %451 = vector.load %arg8[%c0_134, %c0_135] : memref<8x128xf32, #tpu.memory_space<vmem>>, vector<8x128xf32>
    tpu.vector_store %arg8[%c0_134, %c0_135], %450 {strides = array<i32>} : memref<8x128xf32, #tpu.memory_space<vmem>>, vector<8x128xf32>,
    return
  }
  func.func @transform_0(%arg0: i32) -> (i32, i32, i32) {
    %c0_i32 = arith.constant 0 : i32
    %c0_i32_0 = arith.constant 0 : i32
    %c0_i32_1 = arith.constant 0 : i32
    return %c0_i32, %arg0, %c0_i32_0 : i32, i32, i32
  }
  func.func @transform_1(%arg0: i32) -> (i32, i32) {
    %c0_i32 = arith.constant 0 : i32
    %c0_i32_0 = arith.constant 0 : i32
    %c0_i32_1 = arith.constant 0 : i32
    return %c0_i32, %c0_i32_0 : i32, i32
  }
  func.func @transform_2(%arg0: i32) -> (i32, i32) {
    %c0_i32 = arith.constant 0 : i32
    %c0_i32_0 = arith.constant 0 : i32
    %c0_i32_1 = arith.constant 0 : i32
    return %c0_i32, %c0_i32_0 : i32, i32
  }
  func.func @transform_3(%arg0: i32) -> (i32, i32) {
    %c0_i32 = arith.constant 0 : i32
    %c0_i32_0 = arith.constant 0 : i32
    %c0_i32_1 = arith.constant 0 : i32
    return %c0_i32, %c0_i32_0 : i32, i32
  }
  func.func @transform_4(%arg0: i32) -> (i32, i32) {
    %c0_i32 = arith.constant 0 : i32
    %c0_i32_0 = arith.constant 0 : i32
    %c0_i32_1 = arith.constant 0 : i32
    return %c0_i32, %c0_i32_0 : i32, i32
  }
  func.func @transform_5(%arg0: i32) -> (i32, i32) {
    %c0_i32 = arith.constant 0 : i32
    %c0_i32_0 = arith.constant 0 : i32
    %c0_i32_1 = arith.constant 0 : i32
    return %c0_i32, %c0_i32_0 : i32, i32
  }
  func.func @transform_6(%arg0: i32) -> (i32, i32) {
    %c0_i32 = arith.constant 0 : i32
    %c0_i32_0 = arith.constant 0 : i32
    return %arg0, %c0_i32 : i32, i32
  }
  func.func @transform_7(%arg0: i32) -> (i32, i32) {
    %c0_i32 = arith.constant 0 : i32
    %c0_i32_0 = arith.constant 0 : i32
    return %arg0, %c0_i32 : i32, i32
  }
}

</mosaic_0001>

<llo_original>
// kernel: tpu_custom_call.1
$region0: #{tpu_custom_call.1}
  #allocation0 [shape = 'u32[]', space=smem, size = 0x4, offset = 0x4, fixed_abs, tag = 'smem constant byte address 0x4 - core index']
  #allocation1 [shape = 'u32[72,128]{1,0:T(1,128)}', space=vmem, size = 0x9000, scoped, tag = 'internal scratch']
  #allocation2 [shape = 'f32[16,8,128]{2,1,0:T(8,128)}', space=vmem, size = 0x10000, scoped, tag = 'scratch operand']
  %s0 = inlined_call_operand.hbm [shape: f32[16,8,64], index: 0, kind: input, shape index: {}]
  %s1 = inlined_call_operand.hbm [shape: f32[64,128], index: 1, kind: input, shape index: {}]
  %s2 = inlined_call_operand.vmem [shape: f32[1,128], index: 2, kind: input, shape index: {}]
  %s3 = inlined_call_operand.hbm [shape: f32[32,128], index: 3, kind: input, shape index: {}]
  %s4 = inlined_call_operand.hbm [shape: f32[32,128], index: 4, kind: input, shape index: {}]
  %s5 = inlined_call_operand.vmem [shape: f32[1,128], index: 5, kind: input, shape index: {}]
  %s6 = inlined_call_operand.hbm [shape: f32[8,32], index: 6, kind: output, shape index: {0}]
  %s7 = inlined_call_operand.hbm [shape: f32[8,128], index: 7, kind: output, shape index: {1}]
  %8 = xla_tuple %s6, %s7
  %s9 = sld [smem:[#allocation0]]
  $region58: #{tpu_custom_call.1} parent=0
    _
  %s11 = ssub.s32 1, %s9
  %s12 = scalar_select 0, %s11, %s9
  $region1: #{tpu_custom_call.1} parent=0
    #allocation3 [shape = 'u8[65536]{0}', space=vmem, size = 0x10000, scoped, tag = 'input window, operand 0, single buffered']
    #allocation4 [shape = 's32[1]{0}', space=sflag, size = 0x4, scoped, tag = 'scoped memory for tpu_custom_call.1']
    #allocation5 [shape = 's32[1]{0}', space=sflag, size = 0x4, scoped, tag = 'scoped memory for tpu_custom_call.1']
    #allocation6 [shape = 'u8[32768]{0}', space=vmem, size = 0x8000, scoped, tag = 'input window, operand 1, single buffered']
    #allocation7 [shape = 's32[1]{0}', space=sflag, size = 0x4, scoped, tag = 'scoped memory for tpu_custom_call.1']
    #allocation8 [shape = 'u8[16384]{0}', space=vmem, size = 0x4000, scoped, tag = 'input window, operand 3, single buffered']
    #allocation9 [shape = 'u8[16384]{0}', space=vmem, size = 0x4000, scoped, tag = 'input window, operand 4, single buffered']
    #allocation10 [shape = 's32[1]{0}', space=sflag, size = 0x4, scoped, tag = 'scoped memory for tpu_custom_call.1']
    #allocation11 [shape = 'u8[4096]{0}', space=vmem, size = 0x1000, scoped, tag = 'output window, operand 0, single buffered']
    #allocation12 [shape = 'u8[4096]{0}', space=vmem, size = 0x1000, scoped, tag = 'output window, operand 1, single buffered']
    #allocation13 [shape = 's32[1]{0}', space=sflag, size = 0x4, scoped, tag = 'scoped memory for tpu_custom_call.1']
    %13 = vsyncpa [#allocation4], 0
    %14 = vsyncpa [#allocation7], 0
    %15 = vsyncpa [#allocation10], 0
    %16 = vsyncpa [#allocation5], 0
    %17 = vsyncpa [#allocation13], 0
    // Predicated region
    $region2: #{tpu_custom_call.1} parent=1 // pred_check
      _
    $region3: #{tpu_custom_call.1} parent=1 // pred_check_branch
      %19 = sbr.rel (0) target = $region5
    $region4: #{tpu_custom_call.1} parent=1 // pred_region
      %21 = vsyncadd [#allocation4], 0
      %s22 = sshll.u32 %s0, 4
      %s23 = int_to_ptr.hbm [resolvable:$true] %s22
      %s24 = sshll.u32 [#allocation3], 4
      %s25 = int_to_ptr.vmem [resolvable:$true] %s24
      %30 = dma.hbm_to_vmem [thread:$0]  %s23, 2048, %s25, [#allocation4], 128, 128, 8
    $region5: #{tpu_custom_call.1} parent=1 // pred_fallthru
      _
    // Predicated region
    $region6: #{tpu_custom_call.1} parent=1 // pred_check
      _
    $region7: #{tpu_custom_call.1} parent=1 // pred_check_branch
      %32 = sbr.rel (0) target = $region9
    $region8: #{tpu_custom_call.1} parent=1 // pred_region
      %34 = vsyncadd [#allocation7], 0
      %s35 = sshll.u32 %s1, 4
      %s36 = int_to_ptr.hbm [resolvable:$true] %s35
      %s37 = sshll.u32 [#allocation6], 4
      %s38 = int_to_ptr.vmem [resolvable:$true] %s37
      %43 = dma.hbm_to_vmem [thread:$0]  %s36, 1024, %s38, [#allocation7], 128, 128, 8
    $region9: #{tpu_custom_call.1} parent=1 // pred_fallthru
      _
    // Predicated region
    $region10: #{tpu_custom_call.1} parent=1 // pred_check
      _
    $region11: #{tpu_custom_call.1} parent=1 // pred_check_branch
      %45 = sbr.rel (0) target = $region13
    $region12: #{tpu_custom_call.1} parent=1 // pred_region
      _
    $region13: #{tpu_custom_call.1} parent=1 // pred_fallthru
      _
    // Predicated region
    $region14: #{tpu_custom_call.1} parent=1 // pred_check
      _
    $region15: #{tpu_custom_call.1} parent=1 // pred_check_branch
      %47 = sbr.rel (0) target = $region17
    $region16: #{tpu_custom_call.1} parent=1 // pred_region
      %49 = vsyncadd [#allocation7], 0
      %s50 = sshll.u32 %s3, 4
      %s51 = int_to_ptr.hbm [resolvable:$true] %s50
      %s52 = sshll.u32 [#allocation8], 4
      %s53 = int_to_ptr.vmem [resolvable:$true] %s52
      %58 = dma.hbm_to_vmem [thread:$0]  %s51, 512, %s53, [#allocation7], 128, 128, 8
    $region17: #{tpu_custom_call.1} parent=1 // pred_fallthru
      _
    // Predicated region
    $region18: #{tpu_custom_call.1} parent=1 // pred_check
      _
    $region19: #{tpu_custom_call.1} parent=1 // pred_check_branch
      %60 = sbr.rel (0) target = $region21
    $region20: #{tpu_custom_call.1} parent=1 // pred_region
      %62 = vsyncadd [#allocation10], 0
      %s63 = sshll.u32 %s4, 4
      %s64 = int_to_ptr.hbm [resolvable:$true] %s63
      %s65 = sshll.u32 [#allocation9], 4
      %s66 = int_to_ptr.vmem [resolvable:$true] %s65
      %71 = dma.hbm_to_vmem [thread:$0]  %s64, 512, %s66, [#allocation10], 128, 128, 8
    $region21: #{tpu_custom_call.1} parent=1 // pred_fallthru
      _
    // Predicated region
    $region22: #{tpu_custom_call.1} parent=1 // pred_check
      _
    $region23: #{tpu_custom_call.1} parent=1 // pred_check_branch
      %73 = sbr.rel (0) target = $region25
    $region24: #{tpu_custom_call.1} parent=1 // pred_region
      _
    $region25: #{tpu_custom_call.1} parent=1 // pred_fallthru
      _
    // Predicated region
    $region26: #{tpu_custom_call.1} parent=1 // pred_check
      _
    $region27: #{tpu_custom_call.1} parent=1 // pred_check_branch
      %75 = sbr.rel (0) target = $region29
    $region28: #{tpu_custom_call.1} parent=1 // pred_region
      %77 = dma.done [#allocation4], 2048
    $region29: #{tpu_custom_call.1} parent=1 // pred_fallthru
      _
    // Predicated region
    $region30: #{tpu_custom_call.1} parent=1 // pred_check
      _
    $region31: #{tpu_custom_call.1} parent=1 // pred_check_branch
      %79 = sbr.rel (0) target = $region33
    $region32: #{tpu_custom_call.1} parent=1 // pred_region
      %81 = dma.done [#allocation7], 1024
    $region33: #{tpu_custom_call.1} parent=1 // pred_fallthru
      _
    // Predicated region
    $region34: #{tpu_custom_call.1} parent=1 // pred_check
      _
    $region35: #{tpu_custom_call.1} parent=1 // pred_check_branch
      %83 = sbr.rel (0) target = $region37
    $region36: #{tpu_custom_call.1} parent=1 // pred_region
      %85 = dma.done [#allocation7], 512
    $region37: #{tpu_custom_call.1} parent=1 // pred_fallthru
      _
    // Predicated region
    $region38: #{tpu_custom_call.1} parent=1 // pred_check
      _
    $region39: #{tpu_custom_call.1} parent=1 // pred_check_branch
      %87 = sbr.rel (0) target = $region41
    $region40: #{tpu_custom_call.1} parent=1 // pred_region
      %89 = dma.done [#allocation10], 512
    $region41: #{tpu_custom_call.1} parent=1 // pred_fallthru
      _
    %v90 = vld [vmem:[#allocation3] sm:$0xff]
    %v91 = vld [vmem:[#allocation3 + $0x8] sm:$0xff]
    %v92 = vld [vmem:[#allocation3 + $0x10] sm:$0xff]
    %v93 = vld [vmem:[#allocation3 + $0x18] sm:$0xff]
    %v94 = vld [vmem:[#allocation3 + $0x20] sm:$0xff]
    %v95 = vld [vmem:[#allocation3 + $0x28] sm:$0xff]
    %v96 = vld [vmem:[#allocation3 + $0x30] sm:$0xff]
    %v97 = vld [vmem:[#allocation3 + $0x38] sm:$0xff]
    %v98 = vld [vmem:[#allocation3 + $0x40] sm:$0xff]
    %v99 = vld [vmem:[#allocation3 + $0x48] sm:$0xff]
    %v100 = vld [vmem:[#allocation3 + $0x50] sm:$0xff]
    %v101 = vld [vmem:[#allocation3 + $0x58] sm:$0xff]
    %v102 = vld [vmem:[#allocation3 + $0x60] sm:$0xff]
    %v103 = vld [vmem:[#allocation3 + $0x68] sm:$0xff]
    %v104 = vld [vmem:[#allocation3 + $0x70] sm:$0xff]
    %v105 = vld [vmem:[#allocation3 + $0x78] sm:$0xff]
    %v106 = vld [vmem:[#allocation6] sm:$0xff]
    %v107 = vld [vmem:[#allocation6 + $0x8] sm:$0xff]
    %v108 = vld [vmem:[#allocation6 + $0x10] sm:$0xff]
    %v109 = vld [vmem:[#allocation6 + $0x18] sm:$0xff]
    %v110 = vld [vmem:[#allocation6 + $0x20] sm:$0xff]
    %v111 = vld [vmem:[#allocation6 + $0x28] sm:$0xff]
    %v112 = vld [vmem:[#allocation6 + $0x30] sm:$0xff]
    %v113 = vld [vmem:[#allocation6 + $0x38] sm:$0xff]
    %v114 = vld [vmem:[%s2] sm:$0x1]
    %v116 = vperm.slane %v114, 0
    %vm118 = vcmask 523264
    %v120 = vsel %vm118, %v90, 0
    %v123 = vsel %vm118, %v91, 0
    %v126 = vsel %vm118, %v92, 0
    %v129 = vsel %vm118, %v93, 0
    %v132 = vsel %vm118, %v94, 0
    %v135 = vsel %vm118, %v95, 0
    %v138 = vsel %vm118, %v96, 0
    %v141 = vsel %vm118, %v97, 0
    %v144 = vsel %vm118, %v98, 0
    %v147 = vsel %vm118, %v99, 0
    %v150 = vsel %vm118, %v100, 0
    %v153 = vsel %vm118, %v101, 0
    %v156 = vsel %vm118, %v102, 0
    %v159 = vsel %vm118, %v103, 0
    %v162 = vsel %vm118, %v104, 0
    %v165 = vsel %vm118, %v105, 0
    %167 = vmatpush.msra.mxu0 0.0
    %168 = vmatpush.msra.mxu0 0.0
    %169 = vmatpush.msra.mxu0 0.0
    %170 = vmatpush.msra.mxu0 0.0
    %171 = vmatpush.msra.mxu0 0.0
    %172 = vmatpush.msra.mxu0 0.0
    %173 = vmatpush.msra.mxu0 0.0
    %174 = vmatpush.msra.mxu0 0.0
    %175 = vmatpush.msra.mxu0 %v113
    %176 = vmatpush.msra.mxu0 %v112
    %177 = vmatpush.msra.mxu0 %v111
    %178 = vmatpush.msra.mxu0 %v110
    %179 = vmatpush.msra.mxu0 %v109
    %180 = vmatpush.msra.mxu0 %v108
    %181 = vmatpush.msra.mxu0 %v107
    %182 = vmatpush.msra.mxu0 %v106
    %183 = vmatmul.f32.gmra.mxu0 %v120
    %v184 = vpop.f32.mrf.mxu0
    %v185 = vadd.f32 %v116, %v184
    %186 = vmatmul.f32.gmra.mxu0 %v123
    %v187 = vpop.f32.mrf.mxu0
    %v188 = vadd.f32 %v116, %v187
    %189 = vmatmul.f32.gmra.mxu0 %v126
    %v190 = vpop.f32.mrf.mxu0
    %v191 = vadd.f32 %v116, %v190
    %192 = vmatmul.f32.gmra.mxu0 %v129
    %v193 = vpop.f32.mrf.mxu0
    %v194 = vadd.f32 %v116, %v193
    %195 = vmatmul.f32.gmra.mxu0 %v132
    %v196 = vpop.f32.mrf.mxu0
    %v197 = vadd.f32 %v116, %v196
    %198 = vmatmul.f32.gmra.mxu0 %v135
    %v199 = vpop.f32.mrf.mxu0
    %v200 = vadd.f32 %v116, %v199
    %201 = vmatmul.f32.gmra.mxu0 %v138
    %v202 = vpop.f32.mrf.mxu0
    %v203 = vadd.f32 %v116, %v202
    %204 = vmatmul.f32.gmra.mxu0 %v141
    %v205 = vpop.f32.mrf.mxu0
    %v206 = vadd.f32 %v116, %v205
    %207 = vmatmul.f32.gmra.mxu0 %v144
    %v208 = vpop.f32.mrf.mxu0
    %v209 = vadd.f32 %v116, %v208
    %210 = vmatmul.f32.gmra.mxu0 %v147
    %v211 = vpop.f32.mrf.mxu0
    %v212 = vadd.f32 %v116, %v211
    %213 = vmatmul.f32.gmra.mxu0 %v150
    %v214 = vpop.f32.mrf.mxu0
    %v215 = vadd.f32 %v116, %v214
    %216 = vmatmul.f32.gmra.mxu0 %v153
    %v217 = vpop.f32.mrf.mxu0
    %v218 = vadd.f32 %v116, %v217
    %219 = vmatmul.f32.gmra.mxu0 %v156
    %v220 = vpop.f32.mrf.mxu0
    %v221 = vadd.f32 %v116, %v220
    %222 = vmatmul.f32.gmra.mxu0 %v159
    %v223 = vpop.f32.mrf.mxu0
    %v224 = vadd.f32 %v116, %v223
    %225 = vmatmul.f32.gmra.mxu0 %v162
    %v226 = vpop.f32.mrf.mxu0
    %v227 = vadd.f32 %v116, %v226
    %228 = vmatmul.f32.gmra.mxu0 %v165
    %v229 = vpop.f32.mrf.mxu0
    %v230 = vadd.f32 %v116, %v229
    %231 = vdwg.mxu0
    %232 = vst [vmem:[#allocation2] sm:$0xff] %v185
    %233 = vst [vmem:[#allocation2 + $0x8] sm:$0xff] %v188
    %234 = vst [vmem:[#allocation2 + $0x10] sm:$0xff] %v191
    %235 = vst [vmem:[#allocation2 + $0x18] sm:$0xff] %v194
    %236 = vst [vmem:[#allocation2 + $0x20] sm:$0xff] %v197
    %237 = vst [vmem:[#allocation2 + $0x28] sm:$0xff] %v200
    %238 = vst [vmem:[#allocation2 + $0x30] sm:$0xff] %v203
    %239 = vst [vmem:[#allocation2 + $0x38] sm:$0xff] %v206
    %240 = vst [vmem:[#allocation2 + $0x40] sm:$0xff] %v209
    %241 = vst [vmem:[#allocation2 + $0x48] sm:$0xff] %v212
    %242 = vst [vmem:[#allocation2 + $0x50] sm:$0xff] %v215
    %243 = vst [vmem:[#allocation2 + $0x58] sm:$0xff] %v218
    %244 = vst [vmem:[#allocation2 + $0x60] sm:$0xff] %v221
    %245 = vst [vmem:[#allocation2 + $0x68] sm:$0xff] %v224
    %246 = vst [vmem:[#allocation2 + $0x70] sm:$0xff] %v227
    %247 = vst [vmem:[#allocation2 + $0x78] sm:$0xff] %v230
    %v248 = vlaneseq
    %v249 = vand.u32 %v248, 127
    %vm250 = vcmp.ge.s32.totalorder %v249, 64
    %vm251 = vcmp.lt.s32.totalorder %v249, 96
    %vm252 = vmand %vm250, %vm251
    %v253 = vld [vmem:[#allocation2] sm:$0xff]
    %v254 = vld [vmem:[#allocation8] sm:$0xff]
    %v255 = vld [vmem:[#allocation8 + $0x8] sm:$0xff]
    %v256 = vld [vmem:[#allocation8 + $0x10] sm:$0xff]
    %v257 = vld [vmem:[#allocation8 + $0x18] sm:$0xff]
    %vm258 = vcmask 261120
    %v260 = vsel %vm258, 0.0, 0
    %262 = vmatpush.msra.mxu0 0.0
    %263 = vmatpush.msra.mxu0 0.0
    %264 = vmatpush.msra.mxu0 0.0
    %265 = vmatpush.msra.mxu0 0.0
    %266 = vmatpush.msra.mxu0 0.0
    %267 = vmatpush.msra.mxu0 0.0
    %268 = vmatpush.msra.mxu0 0.0
    %269 = vmatpush.msra.mxu0 0.0
    %270 = vmatpush.msra.mxu0 0.0
    %271 = vmatpush.msra.mxu0 0.0
    %272 = vmatpush.msra.mxu0 0.0
    %273 = vmatpush.msra.mxu0 0.0
    %274 = vmatpush.msra.mxu0 %v257
    %275 = vmatpush.msra.mxu0 %v256
    %276 = vmatpush.msra.mxu0 %v255
    %277 = vmatpush.msra.mxu0 %v254
    %278 = vmatmul.f32.gmra.mxu0 %v260
    %v279 = vpop.f32.mrf.mxu0
    %v280 = vadd.f32 0.0, %v279
    %281 = vdwg.mxu0
    %v282 = vadd.f32 %v253, %v280
    %v283 = vtanh.pop %v282
    %v284 = vxor.u32 %v282, 2147483648
    %v285 = vmul.f32 %v284, 1.442695
    %v286 = vpow.pop %v285
    %v287 = vadd.f32 %v286, 1.0
    %v288 = vrcp.pop %v287
    %v289 = vmul.f32 %v287, %v288
    %v290 = vsub.f32 1.0, %v289
    %v291 = vmul.f32 %v288, %v290
    %v292 = vadd.f32 %v288, %v291
    %vm293 = vweird.f32 %v287
    %vm294 = vweird.f32 %v288
    %vm295 = vmor %vm293, %vm294
    %v296 = vsel %vm295, %v288, %v292
    %v297 = vand.u32 2147483647, %v287
    %vm298 = vcmp.eq.f32.partialorder %v297, 8.507059e+37
    %v299 = vand.u32 %v287, 2147483648
    %v300 = vor.u32 1.1754944e-38, %v299
    %v301 = vsel %vm298, %v300, %v296
    %v302 = vmul.f32 1.0, %v301
    %v303 = vsel %vm252, %v283, %v302
    %v304 = vmul.f32 %v303, 0.0
    %306 = vrot.lane.b32.xlu0 %v303, 64
    %v307 = vpop.permute.xlu0 %306
    %v309 = vmul.f32 %v303, %v307
    %311 = vrot.lane.b32.xlu0 %v309, 32
    %v312 = vpop.permute.xlu0 %311
    %v314 = vadd.f32 %v304, %v312
    %v315 = vtanh.pop %v314
    %317 = vrot.lane.b32.xlu0 %v315, 64
    %v318 = vpop.permute.xlu0 %317
    %v320 = vmul.f32 %v303, %v318
    %s321 = scalar_lea.vmem [#allocation2], 8
    %v322 = vld [vmem:[%s321] sm:$0xff]
    %324 = vrot.lane.b32.xlu0 %v320, 32
    %v325 = vpop.permute.xlu0 %324
    %v326 = vsel %vm258, %v325, 0
    %328 = vmatpush.msra.mxu0 0.0
    %329 = vmatpush.msra.mxu0 0.0
    %330 = vmatpush.msra.mxu0 0.0
    %331 = vmatpush.msra.mxu0 0.0
    %332 = vmatpush.msra.mxu0 0.0
    %333 = vmatpush.msra.mxu0 0.0
    %334 = vmatpush.msra.mxu0 0.0
    %335 = vmatpush.msra.mxu0 0.0
    %336 = vmatpush.msra.mxu0 0.0
    %337 = vmatpush.msra.mxu0 0.0
    %338 = vmatpush.msra.mxu0 0.0
    %339 = vmatpush.msra.mxu0 0.0
    %340 = vmatpush.msra.mxu0 %v257
    %341 = vmatpush.msra.mxu0 %v256
    %342 = vmatpush.msra.mxu0 %v255
    %343 = vmatpush.msra.mxu0 %v254
    %344 = vmatmul.f32.gmra.mxu0 %v326
    %v345 = vpop.f32.mrf.mxu0
    %v346 = vadd.f32 0.0, %v345
    %347 = vdwg.mxu0
    %v348 = vadd.f32 %v322, %v346
    %v349 = vtanh.pop %v348
    %v350 = vxor.u32 %v348, 2147483648
    %v351 = vmul.f32 %v350, 1.442695
    %v352 = vpow.pop %v351
    %v353 = vadd.f32 %v352, 1.0
    %v354 = vrcp.pop %v353
    %v355 = vmul.f32 %v353, %v354
    %v356 = vsub.f32 1.0, %v355
    %v357 = vmul.f32 %v354, %v356
    %v358 = vadd.f32 %v354, %v357
    %vm359 = vweird.f32 %v353
    %vm360 = vweird.f32 %v354
    %vm361 = vmor %vm359, %vm360
    %v362 = vsel %vm361, %v354, %v358
    %v363 = vand.u32 2147483647, %v353
    %vm364 = vcmp.eq.f32.partialorder %v363, 8.507059e+37
    %v365 = vand.u32 %v353, 2147483648
    %v366 = vor.u32 1.1754944e-38, %v365
    %v367 = vsel %vm364, %v366, %v362
    %v368 = vmul.f32 1.0, %v367
    %v369 = vsel %vm252, %v349, %v368
    %v370 = vmul.f32 %v369, %v314
    %372 = vrot.lane.b32.xlu0 %v369, 64
    %v373 = vpop.permute.xlu0 %372
    %v375 = vmul.f32 %v369, %v373
    %377 = vrot.lane.b32.xlu0 %v375, 32
    %v378 = vpop.permute.xlu0 %377
    %v380 = vadd.f32 %v370, %v378
    %v381 = vtanh.pop %v380
    %383 = vrot.lane.b32.xlu0 %v381, 64
    %v384 = vpop.permute.xlu0 %383
    %v386 = vmul.f32 %v369, %v384
    %s387 = scalar_lea.vmem [#allocation2], 16
    %v388 = vld [vmem:[%s387] sm:$0xff]
    %390 = vrot.lane.b32.xlu0 %v386, 32
    %v391 = vpop.permute.xlu0 %390
    %v392 = vsel %vm258, %v391, 0
    %394 = vmatpush.msra.mxu0 0.0
    %395 = vmatpush.msra.mxu0 0.0
    %396 = vmatpush.msra.mxu0 0.0
    %397 = vmatpush.msra.mxu0 0.0
    %398 = vmatpush.msra.mxu0 0.0
    %399 = vmatpush.msra.mxu0 0.0
    %400 = vmatpush.msra.mxu0 0.0
    %401 = vmatpush.msra.mxu0 0.0
    %402 = vmatpush.msra.mxu0 0.0
    %403 = vmatpush.msra.mxu0 0.0
    %404 = vmatpush.msra.mxu0 0.0
    %405 = vmatpush.msra.mxu0 0.0
    %406 = vmatpush.msra.mxu0 %v257
    %407 = vmatpush.msra.mxu0 %v256
    %408 = vmatpush.msra.mxu0 %v255
    %409 = vmatpush.msra.mxu0 %v254
    %410 = vmatmul.f32.gmra.mxu0 %v392
    %v411 = vpop.f32.mrf.mxu0
    %v412 = vadd.f32 0.0, %v411
    %413 = vdwg.mxu0
    %v414 = vadd.f32 %v388, %v412
    %v415 = vtanh.pop %v414
    %v416 = vxor.u32 %v414, 2147483648
    %v417 = vmul.f32 %v416, 1.442695
    %v418 = vpow.pop %v417
    %v419 = vadd.f32 %v418, 1.0
    %v420 = vrcp.pop %v419
    %v421 = vmul.f32 %v419, %v420
    %v422 = vsub.f32 1.0, %v421
    %v423 = vmul.f32 %v420, %v422
    %v424 = vadd.f32 %v420, %v423
    %vm425 = vweird.f32 %v419
    %vm426 = vweird.f32 %v420
    %vm427 = vmor %vm425, %vm426
    %v428 = vsel %vm427, %v420, %v424
    %v429 = vand.u32 2147483647, %v419
    %vm430 = vcmp.eq.f32.partialorder %v429, 8.507059e+37
    %v431 = vand.u32 %v419, 2147483648
    %v432 = vor.u32 1.1754944e-38, %v431
    %v433 = vsel %vm430, %v432, %v428
    %v434 = vmul.f32 1.0, %v433
    %v435 = vsel %vm252, %v415, %v434
    %v436 = vmul.f32 %v435, %v380
    %438 = vrot.lane.b32.xlu0 %v435, 64
    %v439 = vpop.permute.xlu0 %438
    %v441 = vmul.f32 %v435, %v439
    %443 = vrot.lane.b32.xlu0 %v441, 32
    %v444 = vpop.permute.xlu0 %443
    %v446 = vadd.f32 %v436, %v444
    %v447 = vtanh.pop %v446
    %449 = vrot.lane.b32.xlu0 %v447, 64
    %v450 = vpop.permute.xlu0 %449
    %v452 = vmul.f32 %v435, %v450
    %s453 = scalar_lea.vmem [#allocation2], 24
    %v454 = vld [vmem:[%s453] sm:$0xff]
    %456 = vrot.lane.b32.xlu0 %v452, 32
    %v457 = vpop.permute.xlu0 %456
    %v458 = vsel %vm258, %v457, 0
    %460 = vmatpush.msra.mxu0 0.0
    %461 = vmatpush.msra.mxu0 0.0
    %462 = vmatpush.msra.mxu0 0.0
    %463 = vmatpush.msra.mxu0 0.0
    %464 = vmatpush.msra.mxu0 0.0
    %465 = vmatpush.msra.mxu0 0.0
    %466 = vmatpush.msra.mxu0 0.0
    %467 = vmatpush.msra.mxu0 0.0
    %468 = vmatpush.msra.mxu0 0.0
    %469 = vmatpush.msra.mxu0 0.0
    %470 = vmatpush.msra.mxu0 0.0
    %471 = vmatpush.msra.mxu0 0.0
    %472 = vmatpush.msra.mxu0 %v257
    %473 = vmatpush.msra.mxu0 %v256
    %474 = vmatpush.msra.mxu0 %v255
    %475 = vmatpush.msra.mxu0 %v254
    %476 = vmatmul.f32.gmra.mxu0 %v458
    %v477 = vpop.f32.mrf.mxu0
    %v478 = vadd.f32 0.0, %v477
    %479 = vdwg.mxu0
    %v480 = vadd.f32 %v454, %v478
    %v481 = vtanh.pop %v480
    %v482 = vxor.u32 %v480, 2147483648
    %v483 = vmul.f32 %v482, 1.442695
    %v484 = vpow.pop %v483
    %v485 = vadd.f32 %v484, 1.0
    %v486 = vrcp.pop %v485
    %v487 = vmul.f32 %v485, %v486
    %v488 = vsub.f32 1.0, %v487
    %v489 = vmul.f32 %v486, %v488
    %v490 = vadd.f32 %v486, %v489
    %vm491 = vweird.f32 %v485
    %vm492 = vweird.f32 %v486
    %vm493 = vmor %vm491, %vm492
    %v494 = vsel %vm493, %v486, %v490
    %v495 = vand.u32 2147483647, %v485
    %vm496 = vcmp.eq.f32.partialorder %v495, 8.507059e+37
    %v497 = vand.u32 %v485, 2147483648
    %v498 = vor.u32 1.1754944e-38, %v497
    %v499 = vsel %vm496, %v498, %v494
    %v500 = vmul.f32 1.0, %v499
    %v501 = vsel %vm252, %v481, %v500
    %v502 = vmul.f32 %v501, %v446
    %504 = vrot.lane.b32.xlu0 %v501, 64
    %v505 = vpop.permute.xlu0 %504
    %v507 = vmul.f32 %v501, %v505
    %509 = vrot.lane.b32.xlu0 %v507, 32
    %v510 = vpop.permute.xlu0 %509
    %v512 = vadd.f32 %v502, %v510
    %v513 = vtanh.pop %v512
    %515 = vrot.lane.b32.xlu0 %v513, 64
    %v516 = vpop.permute.xlu0 %515
    %v518 = vmul.f32 %v501, %v516
    %s519 = scalar_lea.vmem [#allocation2], 32
    %v520 = vld [vmem:[%s519] sm:$0xff]
    %522 = vrot.lane.b32.xlu0 %v518, 32
    %v523 = vpop.permute.xlu0 %522
    %v524 = vsel %vm258, %v523, 0
    %526 = vmatpush.msra.mxu0 0.0
    %527 = vmatpush.msra.mxu0 0.0
    %528 = vmatpush.msra.mxu0 0.0
    %529 = vmatpush.msra.mxu0 0.0
    %530 = vmatpush.msra.mxu0 0.0
    %531 = vmatpush.msra.mxu0 0.0
    %532 = vmatpush.msra.mxu0 0.0
    %533 = vmatpush.msra.mxu0 0.0
    %534 = vmatpush.msra.mxu0 0.0
    %535 = vmatpush.msra.mxu0 0.0
    %536 = vmatpush.msra.mxu0 0.0
    %537 = vmatpush.msra.mxu0 0.0
    %538 = vmatpush.msra.mxu0 %v257
    %539 = vmatpush.msra.mxu0 %v256
    %540 = vmatpush.msra.mxu0 %v255
    %541 = vmatpush.msra.mxu0 %v254
    %542 = vmatmul.f32.gmra.mxu0 %v524
    %v543 = vpop.f32.mrf.mxu0
    %v544 = vadd.f32 0.0, %v543
    %545 = vdwg.mxu0
    %v546 = vadd.f32 %v520, %v544
    %v547 = vtanh.pop %v546
    %v548 = vxor.u32 %v546, 2147483648
    %v549 = vmul.f32 %v548, 1.442695
    %v550 = vpow.pop %v549
    %v551 = vadd.f32 %v550, 1.0
    %v552 = vrcp.pop %v551
    %v553 = vmul.f32 %v551, %v552
    %v554 = vsub.f32 1.0, %v553
    %v555 = vmul.f32 %v552, %v554
    %v556 = vadd.f32 %v552, %v555
    %vm557 = vweird.f32 %v551
    %vm558 = vweird.f32 %v552
    %vm559 = vmor %vm557, %vm558
    %v560 = vsel %vm559, %v552, %v556
    %v561 = vand.u32 2147483647, %v551
    %vm562 = vcmp.eq.f32.partialorder %v561, 8.507059e+37
    %v563 = vand.u32 %v551, 2147483648
    %v564 = vor.u32 1.1754944e-38, %v563
    %v565 = vsel %vm562, %v564, %v560
    %v566 = vmul.f32 1.0, %v565
    %v567 = vsel %vm252, %v547, %v566
    %v568 = vmul.f32 %v567, %v512
    %570 = vrot.lane.b32.xlu0 %v567, 64
    %v571 = vpop.permute.xlu0 %570
    %v573 = vmul.f32 %v567, %v571
    %575 = vrot.lane.b32.xlu0 %v573, 32
    %v576 = vpop.permute.xlu0 %575
    %v578 = vadd.f32 %v568, %v576
    %v579 = vtanh.pop %v578
    %581 = vrot.lane.b32.xlu0 %v579, 64
    %v582 = vpop.permute.xlu0 %581
    %v584 = vmul.f32 %v567, %v582
    %s585 = scalar_lea.vmem [#allocation2], 40
    %v586 = vld [vmem:[%s585] sm:$0xff]
    %588 = vrot.lane.b32.xlu0 %v584, 32
    %v589 = vpop.permute.xlu0 %588
    %v590 = vsel %vm258, %v589, 0
    %592 = vmatpush.msra.mxu0 0.0
    %593 = vmatpush.msra.mxu0 0.0
    %594 = vmatpush.msra.mxu0 0.0
    %595 = vmatpush.msra.mxu0 0.0
    %596 = vmatpush.msra.mxu0 0.0
    %597 = vmatpush.msra.mxu0 0.0
    %598 = vmatpush.msra.mxu0 0.0
    %599 = vmatpush.msra.mxu0 0.0
    %600 = vmatpush.msra.mxu0 0.0
    %601 = vmatpush.msra.mxu0 0.0
    %602 = vmatpush.msra.mxu0 0.0
    %603 = vmatpush.msra.mxu0 0.0
    %604 = vmatpush.msra.mxu0 %v257
    %605 = vmatpush.msra.mxu0 %v256
    %606 = vmatpush.msra.mxu0 %v255
    %607 = vmatpush.msra.mxu0 %v254
    %608 = vmatmul.f32.gmra.mxu0 %v590
    %v609 = vpop.f32.mrf.mxu0
    %v610 = vadd.f32 0.0, %v609
    %611 = vdwg.mxu0
    %v612 = vadd.f32 %v586, %v610
    %v613 = vtanh.pop %v612
    %v614 = vxor.u32 %v612, 2147483648
    %v615 = vmul.f32 %v614, 1.442695
    %v616 = vpow.pop %v615
    %v617 = vadd.f32 %v616, 1.0
    %v618 = vrcp.pop %v617
    %v619 = vmul.f32 %v617, %v618
    %v620 = vsub.f32 1.0, %v619
    %v621 = vmul.f32 %v618, %v620
    %v622 = vadd.f32 %v618, %v621
    %vm623 = vweird.f32 %v617
    %vm624 = vweird.f32 %v618
    %vm625 = vmor %vm623, %vm624
    %v626 = vsel %vm625, %v618, %v622
    %v627 = vand.u32 2147483647, %v617
    %vm628 = vcmp.eq.f32.partialorder %v627, 8.507059e+37
    %v629 = vand.u32 %v617, 2147483648
    %v630 = vor.u32 1.1754944e-38, %v629
    %v631 = vsel %vm628, %v630, %v626
    %v632 = vmul.f32 1.0, %v631
    %v633 = vsel %vm252, %v613, %v632
    %v634 = vmul.f32 %v633, %v578
    %636 = vrot.lane.b32.xlu0 %v633, 64
    %v637 = vpop.permute.xlu0 %636
    %v639 = vmul.f32 %v633, %v637
    %641 = vrot.lane.b32.xlu0 %v639, 32
    %v642 = vpop.permute.xlu0 %641
    %v644 = vadd.f32 %v634, %v642
    %v645 = vtanh.pop %v644
    %647 = vrot.lane.b32.xlu0 %v645, 64
    %v648 = vpop.permute.xlu0 %647
    %v650 = vmul.f32 %v633, %v648
    %s651 = scalar_lea.vmem [#allocation2], 48
    %v652 = vld [vmem:[%s651] sm:$0xff]
    %654 = vrot.lane.b32.xlu0 %v650, 32
    %v655 = vpop.permute.xlu0 %654
    %v656 = vsel %vm258, %v655, 0
    %658 = vmatpush.msra.mxu0 0.0
    %659 = vmatpush.msra.mxu0 0.0
    %660 = vmatpush.msra.mxu0 0.0
    %661 = vmatpush.msra.mxu0 0.0
    %662 = vmatpush.msra.mxu0 0.0
    %663 = vmatpush.msra.mxu0 0.0
    %664 = vmatpush.msra.mxu0 0.0
    %665 = vmatpush.msra.mxu0 0.0
    %666 = vmatpush.msra.mxu0 0.0
    %667 = vmatpush.msra.mxu0 0.0
    %668 = vmatpush.msra.mxu0 0.0
    %669 = vmatpush.msra.mxu0 0.0
    %670 = vmatpush.msra.mxu0 %v257
    %671 = vmatpush.msra.mxu0 %v256
    %672 = vmatpush.msra.mxu0 %v255
    %673 = vmatpush.msra.mxu0 %v254
    %674 = vmatmul.f32.gmra.mxu0 %v656
    %v675 = vpop.f32.mrf.mxu0
    %v676 = vadd.f32 0.0, %v675
    %677 = vdwg.mxu0
    %v678 = vadd.f32 %v652, %v676
    %v679 = vtanh.pop %v678
    %v680 = vxor.u32 %v678, 2147483648
    %v681 = vmul.f32 %v680, 1.442695
    %v682 = vpow.pop %v681
    %v683 = vadd.f32 %v682, 1.0
    %v684 = vrcp.pop %v683
    %v685 = vmul.f32 %v683, %v684
    %v686 = vsub.f32 1.0, %v685
    %v687 = vmul.f32 %v684, %v686
    %v688 = vadd.f32 %v684, %v687
    %vm689 = vweird.f32 %v683
    %vm690 = vweird.f32 %v684
    %vm691 = vmor %vm689, %vm690
    %v692 = vsel %vm691, %v684, %v688
    %v693 = vand.u32 2147483647, %v683
    %vm694 = vcmp.eq.f32.partialorder %v693, 8.507059e+37
    %v695 = vand.u32 %v683, 2147483648
    %v696 = vor.u32 1.1754944e-38, %v695
    %v697 = vsel %vm694, %v696, %v692
    %v698 = vmul.f32 1.0, %v697
    %v699 = vsel %vm252, %v679, %v698
    %v700 = vmul.f32 %v699, %v644
    %702 = vrot.lane.b32.xlu0 %v699, 64
    %v703 = vpop.permute.xlu0 %702
    %v705 = vmul.f32 %v699, %v703
    %707 = vrot.lane.b32.xlu0 %v705, 32
    %v708 = vpop.permute.xlu0 %707
    %v710 = vadd.f32 %v700, %v708
    %v711 = vtanh.pop %v710
    %713 = vrot.lane.b32.xlu0 %v711, 64
    %v714 = vpop.permute.xlu0 %713
    %v716 = vmul.f32 %v699, %v714
    %s717 = scalar_lea.vmem [#allocation2], 56
    %v718 = vld [vmem:[%s717] sm:$0xff]
    %720 = vrot.lane.b32.xlu0 %v716, 32
    %v721 = vpop.permute.xlu0 %720
    %v722 = vsel %vm258, %v721, 0
    %724 = vmatpush.msra.mxu0 0.0
    %725 = vmatpush.msra.mxu0 0.0
    %726 = vmatpush.msra.mxu0 0.0
    %727 = vmatpush.msra.mxu0 0.0
    %728 = vmatpush.msra.mxu0 0.0
    %729 = vmatpush.msra.mxu0 0.0
    %730 = vmatpush.msra.mxu0 0.0
    %731 = vmatpush.msra.mxu0 0.0
    %732 = vmatpush.msra.mxu0 0.0
    %733 = vmatpush.msra.mxu0 0.0
    %734 = vmatpush.msra.mxu0 0.0
    %735 = vmatpush.msra.mxu0 0.0
    %736 = vmatpush.msra.mxu0 %v257
    %737 = vmatpush.msra.mxu0 %v256
    %738 = vmatpush.msra.mxu0 %v255
    %739 = vmatpush.msra.mxu0 %v254
    %740 = vmatmul.f32.gmra.mxu0 %v722
    %v741 = vpop.f32.mrf.mxu0
    %v742 = vadd.f32 0.0, %v741
    %743 = vdwg.mxu0
    %v744 = vadd.f32 %v718, %v742
    %v745 = vtanh.pop %v744
    %v746 = vxor.u32 %v744, 2147483648
    %v747 = vmul.f32 %v746, 1.442695
    %v748 = vpow.pop %v747
    %v749 = vadd.f32 %v748, 1.0
    %v750 = vrcp.pop %v749
    %v751 = vmul.f32 %v749, %v750
    %v752 = vsub.f32 1.0, %v751
    %v753 = vmul.f32 %v750, %v752
    %v754 = vadd.f32 %v750, %v753
    %vm755 = vweird.f32 %v749
    %vm756 = vweird.f32 %v750
    %vm757 = vmor %vm755, %vm756
    %v758 = vsel %vm757, %v750, %v754
    %v759 = vand.u32 2147483647, %v749
    %vm760 = vcmp.eq.f32.partialorder %v759, 8.507059e+37
    %v761 = vand.u32 %v749, 2147483648
    %v762 = vor.u32 1.1754944e-38, %v761
    %v763 = vsel %vm760, %v762, %v758
    %v764 = vmul.f32 1.0, %v763
    %v765 = vsel %vm252, %v745, %v764
    %v766 = vmul.f32 %v765, %v710
    %768 = vrot.lane.b32.xlu0 %v765, 64
    %v769 = vpop.permute.xlu0 %768
    %v771 = vmul.f32 %v765, %v769
    %773 = vrot.lane.b32.xlu0 %v771, 32
    %v774 = vpop.permute.xlu0 %773
    %v776 = vadd.f32 %v766, %v774
    %v777 = vtanh.pop %v776
    %779 = vrot.lane.b32.xlu0 %v777, 64
    %v780 = vpop.permute.xlu0 %779
    %v782 = vmul.f32 %v765, %v780
    %s783 = scalar_lea.vmem [#allocation2], 64
    %v784 = vld [vmem:[%s783] sm:$0xff]
    %786 = vrot.lane.b32.xlu0 %v782, 32
    %v787 = vpop.permute.xlu0 %786
    %v788 = vsel %vm258, %v787, 0
    %790 = vmatpush.msra.mxu0 0.0
    %791 = vmatpush.msra.mxu0 0.0
    %792 = vmatpush.msra.mxu0 0.0
    %793 = vmatpush.msra.mxu0 0.0
    %794 = vmatpush.msra.mxu0 0.0
    %795 = vmatpush.msra.mxu0 0.0
    %796 = vmatpush.msra.mxu0 0.0
    %797 = vmatpush.msra.mxu0 0.0
    %798 = vmatpush.msra.mxu0 0.0
    %799 = vmatpush.msra.mxu0 0.0
    %800 = vmatpush.msra.mxu0 0.0
    %801 = vmatpush.msra.mxu0 0.0
    %802 = vmatpush.msra.mxu0 %v257
    %803 = vmatpush.msra.mxu0 %v256
    %804 = vmatpush.msra.mxu0 %v255
    %805 = vmatpush.msra.mxu0 %v254
    %806 = vmatmul.f32.gmra.mxu0 %v788
    %v807 = vpop.f32.mrf.mxu0
    %v808 = vadd.f32 0.0, %v807
    %809 = vdwg.mxu0
    %v810 = vadd.f32 %v784, %v808
    %v811 = vtanh.pop %v810
    %v812 = vxor.u32 %v810, 2147483648
    %v813 = vmul.f32 %v812, 1.442695
    %v814 = vpow.pop %v813
    %v815 = vadd.f32 %v814, 1.0
    %v816 = vrcp.pop %v815
    %v817 = vmul.f32 %v815, %v816
    %v818 = vsub.f32 1.0, %v817
    %v819 = vmul.f32 %v816, %v818
    %v820 = vadd.f32 %v816, %v819
    %vm821 = vweird.f32 %v815
    %vm822 = vweird.f32 %v816
    %vm823 = vmor %vm821, %vm822
    %v824 = vsel %vm823, %v816, %v820
    %v825 = vand.u32 2147483647, %v815
    %vm826 = vcmp.eq.f32.partialorder %v825, 8.507059e+37
    %v827 = vand.u32 %v815, 2147483648
    %v828 = vor.u32 1.1754944e-38, %v827
    %v829 = vsel %vm826, %v828, %v824
    %v830 = vmul.f32 1.0, %v829
    %v831 = vsel %vm252, %v811, %v830
    %v832 = vmul.f32 %v831, %v776
    %834 = vrot.lane.b32.xlu0 %v831, 64
    %v835 = vpop.permute.xlu0 %834
    %v837 = vmul.f32 %v831, %v835
    %839 = vrot.lane.b32.xlu0 %v837, 32
    %v840 = vpop.permute.xlu0 %839
    %v842 = vadd.f32 %v832, %v840
    %v843 = vtanh.pop %v842
    %845 = vrot.lane.b32.xlu0 %v843, 64
    %v846 = vpop.permute.xlu0 %845
    %v848 = vmul.f32 %v831, %v846
    %s849 = scalar_lea.vmem [#allocation2], 72
    %v850 = vld [vmem:[%s849] sm:$0xff]
    %852 = vrot.lane.b32.xlu0 %v848, 32
    %v853 = vpop.permute.xlu0 %852
    %v854 = vsel %vm258, %v853, 0
    %856 = vmatpush.msra.mxu0 0.0
    %857 = vmatpush.msra.mxu0 0.0
    %858 = vmatpush.msra.mxu0 0.0
    %859 = vmatpush.msra.mxu0 0.0
    %860 = vmatpush.msra.mxu0 0.0
    %861 = vmatpush.msra.mxu0 0.0
    %862 = vmatpush.msra.mxu0 0.0
    %863 = vmatpush.msra.mxu0 0.0
    %864 = vmatpush.msra.mxu0 0.0
    %865 = vmatpush.msra.mxu0 0.0
    %866 = vmatpush.msra.mxu0 0.0
    %867 = vmatpush.msra.mxu0 0.0
    %868 = vmatpush.msra.mxu0 %v257
    %869 = vmatpush.msra.mxu0 %v256
    %870 = vmatpush.msra.mxu0 %v255
    %871 = vmatpush.msra.mxu0 %v254
    %872 = vmatmul.f32.gmra.mxu0 %v854
    %v873 = vpop.f32.mrf.mxu0
    %v874 = vadd.f32 0.0, %v873
    %875 = vdwg.mxu0
    %v876 = vadd.f32 %v850, %v874
    %v877 = vtanh.pop %v876
    %v878 = vxor.u32 %v876, 2147483648
    %v879 = vmul.f32 %v878, 1.442695
    %v880 = vpow.pop %v879
    %v881 = vadd.f32 %v880, 1.0
    %v882 = vrcp.pop %v881
    %v883 = vmul.f32 %v881, %v882
    %v884 = vsub.f32 1.0, %v883
    %v885 = vmul.f32 %v882, %v884
    %v886 = vadd.f32 %v882, %v885
    %vm887 = vweird.f32 %v881
    %vm888 = vweird.f32 %v882
    %vm889 = vmor %vm887, %vm888
    %v890 = vsel %vm889, %v882, %v886
    %v891 = vand.u32 2147483647, %v881
    %vm892 = vcmp.eq.f32.partialorder %v891, 8.507059e+37
    %v893 = vand.u32 %v881, 2147483648
    %v894 = vor.u32 1.1754944e-38, %v893
    %v895 = vsel %vm892, %v894, %v890
    %v896 = vmul.f32 1.0, %v895
    %v897 = vsel %vm252, %v877, %v896
    %v898 = vmul.f32 %v897, %v842
    %900 = vrot.lane.b32.xlu0 %v897, 64
    %v901 = vpop.permute.xlu0 %900
    %v903 = vmul.f32 %v897, %v901
    %905 = vrot.lane.b32.xlu0 %v903, 32
    %v906 = vpop.permute.xlu0 %905
    %v908 = vadd.f32 %v898, %v906
    %v909 = vtanh.pop %v908
    %911 = vrot.lane.b32.xlu0 %v909, 64
    %v912 = vpop.permute.xlu0 %911
    %v914 = vmul.f32 %v897, %v912
    %s915 = scalar_lea.vmem [#allocation2], 80
    %v916 = vld [vmem:[%s915] sm:$0xff]
    %918 = vrot.lane.b32.xlu0 %v914, 32
    %v919 = vpop.permute.xlu0 %918
    %v920 = vsel %vm258, %v919, 0
    %922 = vmatpush.msra.mxu0 0.0
    %923 = vmatpush.msra.mxu0 0.0
    %924 = vmatpush.msra.mxu0 0.0
    %925 = vmatpush.msra.mxu0 0.0
    %926 = vmatpush.msra.mxu0 0.0
    %927 = vmatpush.msra.mxu0 0.0
    %928 = vmatpush.msra.mxu0 0.0
    %929 = vmatpush.msra.mxu0 0.0
    %930 = vmatpush.msra.mxu0 0.0
    %931 = vmatpush.msra.mxu0 0.0
    %932 = vmatpush.msra.mxu0 0.0
    %933 = vmatpush.msra.mxu0 0.0
    %934 = vmatpush.msra.mxu0 %v257
    %935 = vmatpush.msra.mxu0 %v256
    %936 = vmatpush.msra.mxu0 %v255
    %937 = vmatpush.msra.mxu0 %v254
    %938 = vmatmul.f32.gmra.mxu0 %v920
    %v939 = vpop.f32.mrf.mxu0
    %v940 = vadd.f32 0.0, %v939
    %941 = vdwg.mxu0
    %v942 = vadd.f32 %v916, %v940
    %v943 = vtanh.pop %v942
    %v944 = vxor.u32 %v942, 2147483648
    %v945 = vmul.f32 %v944, 1.442695
    %v946 = vpow.pop %v945
    %v947 = vadd.f32 %v946, 1.0
    %v948 = vrcp.pop %v947
    %v949 = vmul.f32 %v947, %v948
    %v950 = vsub.f32 1.0, %v949
    %v951 = vmul.f32 %v948, %v950
    %v952 = vadd.f32 %v948, %v951
    %vm953 = vweird.f32 %v947
    %vm954 = vweird.f32 %v948
    %vm955 = vmor %vm953, %vm954
    %v956 = vsel %vm955, %v948, %v952
    %v957 = vand.u32 2147483647, %v947
    %vm958 = vcmp.eq.f32.partialorder %v957, 8.507059e+37
    %v959 = vand.u32 %v947, 2147483648
    %v960 = vor.u32 1.1754944e-38, %v959
    %v961 = vsel %vm958, %v960, %v956
    %v962 = vmul.f32 1.0, %v961
    %v963 = vsel %vm252, %v943, %v962
    %v964 = vmul.f32 %v963, %v908
    %966 = vrot.lane.b32.xlu0 %v963, 64
    %v967 = vpop.permute.xlu0 %966
    %v969 = vmul.f32 %v963, %v967
    %971 = vrot.lane.b32.xlu0 %v969, 32
    %v972 = vpop.permute.xlu0 %971
    %v974 = vadd.f32 %v964, %v972
    %v975 = vtanh.pop %v974
    %977 = vrot.lane.b32.xlu0 %v975, 64
    %v978 = vpop.permute.xlu0 %977
    %v980 = vmul.f32 %v963, %v978
    %s981 = scalar_lea.vmem [#allocation2], 88
    %v982 = vld [vmem:[%s981] sm:$0xff]
    %984 = vrot.lane.b32.xlu0 %v980, 32
    %v985 = vpop.permute.xlu0 %984
    %v986 = vsel %vm258, %v985, 0
    %988 = vmatpush.msra.mxu0 0.0
    %989 = vmatpush.msra.mxu0 0.0
    %990 = vmatpush.msra.mxu0 0.0
    %991 = vmatpush.msra.mxu0 0.0
    %992 = vmatpush.msra.mxu0 0.0
    %993 = vmatpush.msra.mxu0 0.0
    %994 = vmatpush.msra.mxu0 0.0
    %995 = vmatpush.msra.mxu0 0.0
    %996 = vmatpush.msra.mxu0 0.0
    %997 = vmatpush.msra.mxu0 0.0
    %998 = vmatpush.msra.mxu0 0.0
    %999 = vmatpush.msra.mxu0 0.0
    %1000 = vmatpush.msra.mxu0 %v257
    %1001 = vmatpush.msra.mxu0 %v256
    %1002 = vmatpush.msra.mxu0 %v255
    %1003 = vmatpush.msra.mxu0 %v254
    %1004 = vmatmul.f32.gmra.mxu0 %v986
    %v1005 = vpop.f32.mrf.mxu0
    %v1006 = vadd.f32 0.0, %v1005
    %1007 = vdwg.mxu0
    %v1008 = vadd.f32 %v982, %v1006
    %v1009 = vtanh.pop %v1008
    %v1010 = vxor.u32 %v1008, 2147483648
    %v1011 = vmul.f32 %v1010, 1.442695
    %v1012 = vpow.pop %v1011
    %v1013 = vadd.f32 %v1012, 1.0
    %v1014 = vrcp.pop %v1013
    %v1015 = vmul.f32 %v1013, %v1014
    %v1016 = vsub.f32 1.0, %v1015
    %v1017 = vmul.f32 %v1014, %v1016
    %v1018 = vadd.f32 %v1014, %v1017
    %vm1019 = vweird.f32 %v1013
    %vm1020 = vweird.f32 %v1014
    %vm1021 = vmor %vm1019, %vm1020
    %v1022 = vsel %vm1021, %v1014, %v1018
    %v1023 = vand.u32 2147483647, %v1013
    %vm1024 = vcmp.eq.f32.partialorder %v1023, 8.507059e+37
    %v1025 = vand.u32 %v1013, 2147483648
    %v1026 = vor.u32 1.1754944e-38, %v1025
    %v1027 = vsel %vm1024, %v1026, %v1022
    %v1028 = vmul.f32 1.0, %v1027
    %v1029 = vsel %vm252, %v1009, %v1028
    %v1030 = vmul.f32 %v1029, %v974
    %1032 = vrot.lane.b32.xlu0 %v1029, 64
    %v1033 = vpop.permute.xlu0 %1032
    %v1035 = vmul.f32 %v1029, %v1033
    %1037 = vrot.lane.b32.xlu0 %v1035, 32
    %v1038 = vpop.permute.xlu0 %1037
    %v1040 = vadd.f32 %v1030, %v1038
    %v1041 = vtanh.pop %v1040
    %1043 = vrot.lane.b32.xlu0 %v1041, 64
    %v1044 = vpop.permute.xlu0 %1043
    %v1046 = vmul.f32 %v1029, %v1044
    %s1047 = scalar_lea.vmem [#allocation2], 96
    %v1048 = vld [vmem:[%s1047] sm:$0xff]
    %1050 = vrot.lane.b32.xlu0 %v1046, 32
    %v1051 = vpop.permute.xlu0 %1050
    %v1052 = vsel %vm258, %v1051, 0
    %1054 = vmatpush.msra.mxu0 0.0
    %1055 = vmatpush.msra.mxu0 0.0
    %1056 = vmatpush.msra.mxu0 0.0
    %1057 = vmatpush.msra.mxu0 0.0
    %1058 = vmatpush.msra.mxu0 0.0
    %1059 = vmatpush.msra.mxu0 0.0
    %1060 = vmatpush.msra.mxu0 0.0
    %1061 = vmatpush.msra.mxu0 0.0
    %1062 = vmatpush.msra.mxu0 0.0
    %1063 = vmatpush.msra.mxu0 0.0
    %1064 = vmatpush.msra.mxu0 0.0
    %1065 = vmatpush.msra.mxu0 0.0
    %1066 = vmatpush.msra.mxu0 %v257
    %1067 = vmatpush.msra.mxu0 %v256
    %1068 = vmatpush.msra.mxu0 %v255
    %1069 = vmatpush.msra.mxu0 %v254
    %1070 = vmatmul.f32.gmra.mxu0 %v1052
    %v1071 = vpop.f32.mrf.mxu0
    %v1072 = vadd.f32 0.0, %v1071
    %1073 = vdwg.mxu0
    %v1074 = vadd.f32 %v1048, %v1072
    %v1075 = vtanh.pop %v1074
    %v1076 = vxor.u32 %v1074, 2147483648
    %v1077 = vmul.f32 %v1076, 1.442695
    %v1078 = vpow.pop %v1077
    %v1079 = vadd.f32 %v1078, 1.0
    %v1080 = vrcp.pop %v1079
    %v1081 = vmul.f32 %v1079, %v1080
    %v1082 = vsub.f32 1.0, %v1081
    %v1083 = vmul.f32 %v1080, %v1082
    %v1084 = vadd.f32 %v1080, %v1083
    %vm1085 = vweird.f32 %v1079
    %vm1086 = vweird.f32 %v1080
    %vm1087 = vmor %vm1085, %vm1086
    %v1088 = vsel %vm1087, %v1080, %v1084
    %v1089 = vand.u32 2147483647, %v1079
    %vm1090 = vcmp.eq.f32.partialorder %v1089, 8.507059e+37
    %v1091 = vand.u32 %v1079, 2147483648
    %v1092 = vor.u32 1.1754944e-38, %v1091
    %v1093 = vsel %vm1090, %v1092, %v1088
    %v1094 = vmul.f32 1.0, %v1093
    %v1095 = vsel %vm252, %v1075, %v1094
    %v1096 = vmul.f32 %v1095, %v1040
    %1098 = vrot.lane.b32.xlu0 %v1095, 64
    %v1099 = vpop.permute.xlu0 %1098
    %v1101 = vmul.f32 %v1095, %v1099
    %1103 = vrot.lane.b32.xlu0 %v1101, 32
    %v1104 = vpop.permute.xlu0 %1103
    %v1106 = vadd.f32 %v1096, %v1104
    %v1107 = vtanh.pop %v1106
    %1109 = vrot.lane.b32.xlu0 %v1107, 64
    %v1110 = vpop.permute.xlu0 %1109
    %v1112 = vmul.f32 %v1095, %v1110
    %s1113 = scalar_lea.vmem [#allocation2], 104
    %v1114 = vld [vmem:[%s1113] sm:$0xff]
    %1116 = vrot.lane.b32.xlu0 %v1112, 32
    %v1117 = vpop.permute.xlu0 %1116
    %v1118 = vsel %vm258, %v1117, 0
    %1120 = vmatpush.msra.mxu0 0.0
    %1121 = vmatpush.msra.mxu0 0.0
    %1122 = vmatpush.msra.mxu0 0.0
    %1123 = vmatpush.msra.mxu0 0.0
    %1124 = vmatpush.msra.mxu0 0.0
    %1125 = vmatpush.msra.mxu0 0.0
    %1126 = vmatpush.msra.mxu0 0.0
    %1127 = vmatpush.msra.mxu0 0.0
    %1128 = vmatpush.msra.mxu0 0.0
    %1129 = vmatpush.msra.mxu0 0.0
    %1130 = vmatpush.msra.mxu0 0.0
    %1131 = vmatpush.msra.mxu0 0.0
    %1132 = vmatpush.msra.mxu0 %v257
    %1133 = vmatpush.msra.mxu0 %v256
    %1134 = vmatpush.msra.mxu0 %v255
    %1135 = vmatpush.msra.mxu0 %v254
    %1136 = vmatmul.f32.gmra.mxu0 %v1118
    %v1137 = vpop.f32.mrf.mxu0
    %v1138 = vadd.f32 0.0, %v1137
    %1139 = vdwg.mxu0
    %v1140 = vadd.f32 %v1114, %v1138
    %v1141 = vtanh.pop %v1140
    %v1142 = vxor.u32 %v1140, 2147483648
    %v1143 = vmul.f32 %v1142, 1.442695
    %v1144 = vpow.pop %v1143
    %v1145 = vadd.f32 %v1144, 1.0
    %v1146 = vrcp.pop %v1145
    %v1147 = vmul.f32 %v1145, %v1146
    %v1148 = vsub.f32 1.0, %v1147
    %v1149 = vmul.f32 %v1146, %v1148
    %v1150 = vadd.f32 %v1146, %v1149
    %vm1151 = vweird.f32 %v1145
    %vm1152 = vweird.f32 %v1146
    %vm1153 = vmor %vm1151, %vm1152
    %v1154 = vsel %vm1153, %v1146, %v1150
    %v1155 = vand.u32 2147483647, %v1145
    %vm1156 = vcmp.eq.f32.partialorder %v1155, 8.507059e+37
    %v1157 = vand.u32 %v1145, 2147483648
    %v1158 = vor.u32 1.1754944e-38, %v1157
    %v1159 = vsel %vm1156, %v1158, %v1154
    %v1160 = vmul.f32 1.0, %v1159
    %v1161 = vsel %vm252, %v1141, %v1160
    %v1162 = vmul.f32 %v1161, %v1106
    %1164 = vrot.lane.b32.xlu0 %v1161, 64
    %v1165 = vpop.permute.xlu0 %1164
    %v1167 = vmul.f32 %v1161, %v1165
    %1169 = vrot.lane.b32.xlu0 %v1167, 32
    %v1170 = vpop.permute.xlu0 %1169
    %v1172 = vadd.f32 %v1162, %v1170
    %v1173 = vtanh.pop %v1172
    %1175 = vrot.lane.b32.xlu0 %v1173, 64
    %v1176 = vpop.permute.xlu0 %1175
    %v1178 = vmul.f32 %v1161, %v1176
    %s1179 = scalar_lea.vmem [#allocation2], 112
    %v1180 = vld [vmem:[%s1179] sm:$0xff]
    %1182 = vrot.lane.b32.xlu0 %v1178, 32
    %v1183 = vpop.permute.xlu0 %1182
    %v1184 = vsel %vm258, %v1183, 0
    %1186 = vmatpush.msra.mxu0 0.0
    %1187 = vmatpush.msra.mxu0 0.0
    %1188 = vmatpush.msra.mxu0 0.0
    %1189 = vmatpush.msra.mxu0 0.0
    %1190 = vmatpush.msra.mxu0 0.0
    %1191 = vmatpush.msra.mxu0 0.0
    %1192 = vmatpush.msra.mxu0 0.0
    %1193 = vmatpush.msra.mxu0 0.0
    %1194 = vmatpush.msra.mxu0 0.0
    %1195 = vmatpush.msra.mxu0 0.0
    %1196 = vmatpush.msra.mxu0 0.0
    %1197 = vmatpush.msra.mxu0 0.0
    %1198 = vmatpush.msra.mxu0 %v257
    %1199 = vmatpush.msra.mxu0 %v256
    %1200 = vmatpush.msra.mxu0 %v255
    %1201 = vmatpush.msra.mxu0 %v254
    %1202 = vmatmul.f32.gmra.mxu0 %v1184
    %v1203 = vpop.f32.mrf.mxu0
    %v1204 = vadd.f32 0.0, %v1203
    %1205 = vdwg.mxu0
    %v1206 = vadd.f32 %v1180, %v1204
    %v1207 = vtanh.pop %v1206
    %v1208 = vxor.u32 %v1206, 2147483648
    %v1209 = vmul.f32 %v1208, 1.442695
    %v1210 = vpow.pop %v1209
    %v1211 = vadd.f32 %v1210, 1.0
    %v1212 = vrcp.pop %v1211
    %v1213 = vmul.f32 %v1211, %v1212
    %v1214 = vsub.f32 1.0, %v1213
    %v1215 = vmul.f32 %v1212, %v1214
    %v1216 = vadd.f32 %v1212, %v1215
    %vm1217 = vweird.f32 %v1211
    %vm1218 = vweird.f32 %v1212
    %vm1219 = vmor %vm1217, %vm1218
    %v1220 = vsel %vm1219, %v1212, %v1216
    %v1221 = vand.u32 2147483647, %v1211
    %vm1222 = vcmp.eq.f32.partialorder %v1221, 8.507059e+37
    %v1223 = vand.u32 %v1211, 2147483648
    %v1224 = vor.u32 1.1754944e-38, %v1223
    %v1225 = vsel %vm1222, %v1224, %v1220
    %v1226 = vmul.f32 1.0, %v1225
    %v1227 = vsel %vm252, %v1207, %v1226
    %v1228 = vmul.f32 %v1227, %v1172
    %1230 = vrot.lane.b32.xlu0 %v1227, 64
    %v1231 = vpop.permute.xlu0 %1230
    %v1233 = vmul.f32 %v1227, %v1231
    %1235 = vrot.lane.b32.xlu0 %v1233, 32
    %v1236 = vpop.permute.xlu0 %1235
    %v1238 = vadd.f32 %v1228, %v1236
    %v1239 = vtanh.pop %v1238
    %1241 = vrot.lane.b32.xlu0 %v1239, 64
    %v1242 = vpop.permute.xlu0 %1241
    %v1244 = vmul.f32 %v1227, %v1242
    %s1245 = scalar_lea.vmem [#allocation2], 120
    %v1246 = vld [vmem:[%s1245] sm:$0xff]
    %1248 = vrot.lane.b32.xlu0 %v1244, 32
    %v1249 = vpop.permute.xlu0 %1248
    %v1250 = vsel %vm258, %v1249, 0
    %1252 = vmatpush.msra.mxu0 0.0
    %1253 = vmatpush.msra.mxu0 0.0
    %1254 = vmatpush.msra.mxu0 0.0
    %1255 = vmatpush.msra.mxu0 0.0
    %1256 = vmatpush.msra.mxu0 0.0
    %1257 = vmatpush.msra.mxu0 0.0
    %1258 = vmatpush.msra.mxu0 0.0
    %1259 = vmatpush.msra.mxu0 0.0
    %1260 = vmatpush.msra.mxu0 0.0
    %1261 = vmatpush.msra.mxu0 0.0
    %1262 = vmatpush.msra.mxu0 0.0
    %1263 = vmatpush.msra.mxu0 0.0
    %1264 = vmatpush.msra.mxu0 %v257
    %1265 = vmatpush.msra.mxu0 %v256
    %1266 = vmatpush.msra.mxu0 %v255
    %1267 = vmatpush.msra.mxu0 %v254
    %1268 = vmatmul.f32.gmra.mxu0 %v1250
    %v1269 = vpop.f32.mrf.mxu0
    %v1270 = vadd.f32 0.0, %v1269
    %1271 = vdwg.mxu0
    %v1272 = vadd.f32 %v1246, %v1270
    %v1273 = vtanh.pop %v1272
    %v1274 = vxor.u32 %v1272, 2147483648
    %v1275 = vmul.f32 %v1274, 1.442695
    %v1276 = vpow.pop %v1275
    %v1277 = vadd.f32 %v1276, 1.0
    %v1278 = vrcp.pop %v1277
    %v1279 = vmul.f32 %v1277, %v1278
    %v1280 = vsub.f32 1.0, %v1279
    %v1281 = vmul.f32 %v1278, %v1280
    %v1282 = vadd.f32 %v1278, %v1281
    %vm1283 = vweird.f32 %v1277
    %vm1284 = vweird.f32 %v1278
    %vm1285 = vmor %vm1283, %vm1284
    %v1286 = vsel %vm1285, %v1278, %v1282
    %v1287 = vand.u32 2147483647, %v1277
    %vm1288 = vcmp.eq.f32.partialorder %v1287, 8.507059e+37
    %v1289 = vand.u32 %v1277, 2147483648
    %v1290 = vor.u32 1.1754944e-38, %v1289
    %v1291 = vsel %vm1288, %v1290, %v1286
    %v1292 = vmul.f32 1.0, %v1291
    %v1293 = vsel %vm252, %v1273, %v1292
    %v1294 = vmul.f32 %v1293, %v1238
    %1296 = vrot.lane.b32.xlu0 %v1293, 64
    %v1297 = vpop.permute.xlu0 %1296
    %v1299 = vmul.f32 %v1293, %v1297
    %1301 = vrot.lane.b32.xlu0 %v1299, 32
    %v1302 = vpop.permute.xlu0 %1301
    %v1304 = vadd.f32 %v1294, %v1302
    %v1305 = vtanh.pop %v1304
    %1307 = vrot.lane.b32.xlu0 %v1305, 64
    %v1308 = vpop.permute.xlu0 %1307
    %v1310 = vmul.f32 %v1293, %v1308
    %1312 = vrot.lane.b32.xlu0 %v1310, 32
    %v1313 = vpop.permute.xlu0 %1312
    %1315 = vst.msk [vmem:[#allocation11] sm:$0xff] %vm258, %v1313
    %v1316 = vld [vmem:[#allocation9] sm:$0xff]
    %v1317 = vld [vmem:[#allocation9 + $0x8] sm:$0xff]
    %v1318 = vld [vmem:[#allocation9 + $0x10] sm:$0xff]
    %v1319 = vld [vmem:[#allocation9 + $0x18] sm:$0xff]
    %v1320 = vld [vmem:[%s5] sm:$0x1]
    %v1322 = vperm.slane %v1320, 0
    %v1324 = vsel %vm258, %v1313, 0
    %1326 = vmatpush.msra.mxu0 0.0
    %1327 = vmatpush.msra.mxu0 0.0
    %1328 = vmatpush.msra.mxu0 0.0
    %1329 = vmatpush.msra.mxu0 0.0
    %1330 = vmatpush.msra.mxu0 0.0
    %1331 = vmatpush.msra.mxu0 0.0
    %1332 = vmatpush.msra.mxu0 0.0
    %1333 = vmatpush.msra.mxu0 0.0
    %1334 = vmatpush.msra.mxu0 0.0
    %1335 = vmatpush.msra.mxu0 0.0
    %1336 = vmatpush.msra.mxu0 0.0
    %1337 = vmatpush.msra.mxu0 0.0
    %1338 = vmatpush.msra.mxu0 %v1319
    %1339 = vmatpush.msra.mxu0 %v1318
    %1340 = vmatpush.msra.mxu0 %v1317
    %1341 = vmatpush.msra.mxu0 %v1316
    %1342 = vmatmul.f32.gmra.mxu0 %v1324
    %v1343 = vpop.f32.mrf.mxu0
    %v1344 = vadd.f32 %v1322, %v1343
    %1345 = vdwg.mxu0
    %vm1346 = vcmp.ge.s32.totalorder %v249, 0
    %vm1347 = vcmp.lt.s32.totalorder %v249, 11
    %vm1348 = vmand %vm1346, %vm1347
    %v1349 = vsel %vm1348, %v1344, -inf
    %1350 = vmax.xlane.f32.xlu0 %v1349
    %v1351 = vpop.xlane.xlu0 %1350
    %v1352 = vsub.f32 %v1344, %v1351
    %v1353 = vmul.f32 %v1352, 1.442695
    %v1354 = vpow.pop %v1353
    %v1355 = vsel %vm1348, %v1354, 0.0
    %1356 = vadd.xlane.f32.xlu0 %v1355
    %v1357 = vpop.xlane.xlu0 %1356
    %v1358 = vlog2.pop %v1357
    %v1359 = vmul.f32 %v1358, 0.6931472
    %v1360 = vadd.f32 %v1359, %v1351
    %v1361 = vsub.f32 %v1344, %v1360
    %vm1362 = vcmp.ge.s32.totalorder %v249, 11
    %vm1363 = vcmp.lt.s32.totalorder %v249, 16
    %vm1364 = vmand %vm1362, %vm1363
    %v1365 = vsel %vm1364, %v1344, -inf
    %1366 = vmax.xlane.f32.xlu0 %v1365
    %v1367 = vpop.xlane.xlu0 %1366
    %v1368 = vsub.f32 %v1344, %v1367
    %v1369 = vmul.f32 %v1368, 1.442695
    %v1370 = vpow.pop %v1369
    %v1371 = vsel %vm1364, %v1370, 0.0
    %1372 = vadd.xlane.f32.xlu0 %v1371
    %v1373 = vpop.xlane.xlu0 %1372
    %v1374 = vlog2.pop %v1373
    %v1375 = vmul.f32 %v1374, 0.6931472
    %v1376 = vadd.f32 %v1375, %v1367
    %v1377 = vsub.f32 %v1344, %v1376
    %vm1378 = vcmp.ge.s32.totalorder %v249, 16
    %vm1379 = vcmp.lt.s32.totalorder %v249, 20
    %vm1380 = vmand %vm1378, %vm1379
    %v1381 = vsel %vm1380, %v1344, -inf
    %1382 = vmax.xlane.f32.xlu0 %v1381
    %v1383 = vpop.xlane.xlu0 %1382
    %v1384 = vsub.f32 %v1344, %v1383
    %v1385 = vmul.f32 %v1384, 1.442695
    %v1386 = vpow.pop %v1385
    %v1387 = vsel %vm1380, %v1386, 0.0
    %1388 = vadd.xlane.f32.xlu0 %v1387
    %v1389 = vpop.xlane.xlu0 %1388
    %v1390 = vlog2.pop %v1389
    %v1391 = vmul.f32 %v1390, 0.6931472
    %v1392 = vadd.f32 %v1391, %v1383
    %v1393 = vsub.f32 %v1344, %v1392
    %vm1394 = vcmp.ge.s32.totalorder %v249, 20
    %vm1395 = vcmp.lt.s32.totalorder %v249, 30
    %vm1396 = vmand %vm1394, %vm1395
    %v1397 = vxor.u32 %v1344, 2147483648
    %v1398 = vmul.f32 %v1397, 1.442695
    %v1399 = vpow.pop %v1398
    %v1400 = vadd.f32 %v1399, 1.0
    %v1401 = vrcp.pop %v1400
    %v1402 = vmul.f32 %v1400, %v1401
    %v1403 = vsub.f32 1.0, %v1402
    %v1404 = vmul.f32 %v1401, %v1403
    %v1405 = vadd.f32 %v1401, %v1404
    %vm1406 = vweird.f32 %v1400
    %vm1407 = vweird.f32 %v1401
    %vm1408 = vmor %vm1406, %vm1407
    %v1409 = vsel %vm1408, %v1401, %v1405
    %v1410 = vand.u32 2147483647, %v1400
    %vm1411 = vcmp.eq.f32.partialorder %v1410, 8.507059e+37
    %v1412 = vand.u32 %v1400, 2147483648
    %v1413 = vor.u32 1.1754944e-38, %v1412
    %v1414 = vsel %vm1411, %v1413, %v1409
    %v1415 = vmul.f32 1.0, %v1414
    %v1416 = vsel %vm1396, %v1415, 0.0
    %v1417 = vsel %vm1380, %v1393, %v1416
    %v1418 = vsel %vm1364, %v1377, %v1417
    %v1419 = vsel %vm1348, %v1361, %v1418
    %1420 = vst [vmem:[#allocation12] sm:$0xff] %v1419
    // Predicated region
    $region42: #{tpu_custom_call.1} parent=1 // pred_check
      _
    $region43: #{tpu_custom_call.1} parent=1 // pred_check_branch
      %1422 = sbr.rel (0) target = $region45
    $region44: #{tpu_custom_call.1} parent=1 // pred_region
      %1424 = vsyncadd [#allocation5], 0
      %s1426 = sshll.u32 [#allocation11], 4
      %s1427 = int_to_ptr.vmem [resolvable:$true] %s1426
      %s1428 = sshll.u32 %s6, 4
      %s1429 = int_to_ptr.hbm [resolvable:$true] %s1428
      %1431 = dma.vmem_to_hbm [thread:$0]  %s1427, 128, %s1429, [#allocation5]
    $region45: #{tpu_custom_call.1} parent=1 // pred_fallthru
      _
    // Predicated region
    $region46: #{tpu_custom_call.1} parent=1 // pred_check
      _
    $region47: #{tpu_custom_call.1} parent=1 // pred_check_branch
      %1433 = sbr.rel (0) target = $region49
    $region48: #{tpu_custom_call.1} parent=1 // pred_region
      %1435 = vsyncadd [#allocation13], 0
      %s1437 = sshll.u32 [#allocation12], 4
      %s1438 = int_to_ptr.vmem [resolvable:$true] %s1437
      %s1439 = sshll.u32 %s7, 4
      %s1440 = int_to_ptr.hbm [resolvable:$true] %s1439
      %1442 = dma.vmem_to_hbm [thread:$0]  %s1438, 128, %s1440, [#allocation13]
    $region49: #{tpu_custom_call.1} parent=1 // pred_fallthru
      _
    // Predicated region
    $region50: #{tpu_custom_call.1} parent=1 // pred_check
      _
    $region51: #{tpu_custom_call.1} parent=1 // pred_check_branch
      %1444 = sbr.rel (0) target = $region53
    $region52: #{tpu_custom_call.1} parent=1 // pred_region
      %1446 = dma.done [#allocation5], 128
    $region53: #{tpu_custom_call.1} parent=1 // pred_fallthru
      _
    // Predicated region
    $region54: #{tpu_custom_call.1} parent=1 // pred_check
      _
    $region55: #{tpu_custom_call.1} parent=1 // pred_check_branch
      %1448 = sbr.rel (0) target = $region57
    $region56: #{tpu_custom_call.1} parent=1 // pred_region
      %1450 = dma.done [#allocation13], 128
    $region57: #{tpu_custom_call.1} parent=1 // pred_fallthru
      _
    %1451 = vsyncpa [#allocation4], 1
    %1452 = vsyncpa [#allocation7], 1
    %1453 = vsyncpa [#allocation10], 1
    %1454 = vsyncpa [#allocation5], 1
    %1455 = vsyncpa [#allocation13], 1

</llo_original>
